<compile_context>
chip_gen: v6e
topology: v6e:2x2x1
jax: 0.10.0
libtpu: 0.0.40
codegen_flags: <defaults>
</compile_context>

<pallas_src>
import functools

import jax
import jax.numpy as jnp
from jax import lax
from jax.experimental import pallas as pl
from jax.experimental.pallas import tpu as pltpu


def lstm_chunk_kernel(x_ref, wih_ref, whh_ref, b_ref,
                      out_ref, cn_ref,
                      gx_scr, h_scr, c_scr,
                      *, t_valid, needs_tail_mask, unroll):
    TT, BT, I = x_ref.shape
    H = h_scr.shape[-1]                 # lane-padded hidden size (multiple of 128)

    n = pl.program_id(1)                # time-chunk axis (recurrent / "arbitrary")

    @pl.when(n == 0)
    def _():
        h_scr[...] = jnp.zeros_like(h_scr)
        c_scr[...] = jnp.zeros_like(c_scr)

    # Whole-chunk input projection: one big bf16 MXU matmul (f32 accumulate) with
    # the fused, pre-scaled bias added once. Stored in bf16 scratch.
    x2d = x_ref[...].reshape(TT * BT, I).astype(jnp.bfloat16)
    gx = jnp.dot(x2d, wih_ref[...], preferred_element_type=jnp.float32) + b_ref[...]
    gx_scr[...] = gx.reshape(TT, BT, 4 * H).astype(gx_scr.dtype)

    whh = whh_ref[...]                  # (H, 4H) bf16, loop-invariant

    def step(t, carry):
        h_prev = h_scr[...]             # (BT, H) f32
        c_prev = c_scr[...]             # (BT, H) f32

        # Exactly one (BT,H)@(H,4H) bf16 MXU dot on the serial path per timestep.
        gates = gx_scr[t].astype(jnp.float32) + jnp.dot(
            h_prev.astype(jnp.bfloat16), whh, preferred_element_type=jnp.float32)

        # One full-width tanh over 4H lanes; i/f/o pre-activations were pre-scaled
        # by 0.5 in the wrapper, so sigmoid(z) == 0.5*tanh(z/2) + 0.5 (FMA only).
        # PyTorch gate order: [i, f, g, o]; each slice is lane-aligned (H % 128 == 0).
        y = jnp.tanh(gates)
        i_g = 0.5 * y[:, 0 * H:1 * H] + 0.5
        f_g = 0.5 * y[:, 1 * H:2 * H] + 0.5
        g_g = y[:, 2 * H:3 * H]
        o_g = 0.5 * y[:, 3 * H:4 * H] + 0.5

        c_new = f_g * c_prev + i_g * g_g
        h_new = o_g * jnp.tanh(c_new)

        if needs_tail_mask:
            # Padded tail timesteps must not advance the recurrent state.
            keep = (n * TT + t) < t_valid
            h_scr[...] = jnp.where(keep, h_new, h_prev)
            c_scr[...] = jnp.where(keep, c_new, c_prev)
        else:
            h_scr[...] = h_new
            c_scr[...] = c_new

        out_ref[t] = h_new.astype(out_ref.dtype)   # lane-dense VMEM store
        return carry

    lax.fori_loop(0, TT, step, 0, unroll=unroll)

    @pl.when(n == pl.num_programs(1) - 1)
    def _():
        cn_ref[0] = c_scr[...].astype(cn_ref.dtype)


def _round_up(x, m):
    return -(-x // m) * m


def _pad_per_gate(w, h, h_pad, axis):
    """Pad each of the 4 stacked gate blocks along `axis` from h to h_pad."""
    if h_pad == h:
        return w
    parts = jnp.split(w, 4, axis=axis)
    pad = [(0, 0)] * w.ndim
    pad[axis] = (0, h_pad - h)
    return jnp.concatenate([jnp.pad(p, pad) for p in parts], axis=axis)


def _vmem_budget_bytes():
    """Conservative per-kernel VMEM budget derived from the actual chip."""
    try:
        cap = pltpu.get_tpu_info().vmem_capacity_bytes
    except Exception:
        cap = 64 * 1024 * 1024          # safe fallback (v7x-sized)
    return int(cap * 0.75)


def _derive_time_chunk(T, BT, I, H_pad, budget_bytes, cap=128):
    """Largest time chunk whose VMEM footprint fits the budget."""
    bf16, f32 = 2, 4
    fixed = (2 * I * 4 * H_pad * bf16          # W_ih^T (double-buffered, bf16)
             + 2 * H_pad * 4 * H_pad * bf16    # W_hh^T (double-buffered, bf16)
             + 2 * 4 * H_pad * f32             # fused bias row
             + 2 * BT * H_pad * f32            # h, c state scratch
             + 2 * BT * H_pad * f32)           # c_n output block (double-buffered)
    per_t = (2 * BT * I * f32                  # x chunk (double-buffered)
             + 2 * BT * H_pad * f32            # output slab (double-buffered)
             + BT * 4 * H_pad * bf16)          # gx scratch (bf16)
    avail = budget_bytes - fixed
    if avail < per_t:
        return 1
    return int(max(1, min(cap, T, avail // per_t)))


def encoder_rnn_forward(input_seqs, w_ih, w_hh, b_ih, b_hh,
                        *, time_chunk=None, batch_tile=None):
    """Single-layer LSTM forward (hidden=None, i.e. zero initial state).

    input_seqs: (T, B, I) ; w_ih: (4H, I) ; w_hh: (4H, H) ; b_ih/b_hh: (4H,)
    Returns: outputs (T, B, H), (h_n, c_n) each (1, B, H).
    """
    T, B, I = input_seqs.shape
    H = w_hh.shape[1]
    out_dtype = input_seqs.dtype

    # Pad batch to sublane multiple (8) and hidden to lane multiple (128) so every
    # gate slice / output store is dense; padded rows/lanes stay zero and are sliced.
    B_pad = _round_up(max(B, 8), 8)
    H_pad = _round_up(max(H, 128), 128)

    BT = batch_tile if batch_tile is not None else min(B_pad, 128)
    BT = _round_up(min(BT, B_pad), 8)
    if B_pad % BT != 0:
        BT = B_pad                      # fall back to a single batch tile
    nb = B_pad // BT

    budget = _vmem_budget_bytes()
    TT = time_chunk if time_chunk is not None else _derive_time_chunk(
        T, BT, I, H_pad, budget)
    TT = int(max(1, min(TT, T)))
    n_chunks = -(-T // TT)
    T_pad = n_chunks * TT               # pad T up instead of shrinking the chunk

    x = input_seqs
    if (T_pad, B_pad) != (T, B):
        x = jnp.pad(x, ((0, T_pad - T), (0, B_pad - B), (0, 0)))

    # Parameters: fuse biases, pre-scale i/f/o rows by 0.5 (sigmoid-via-tanh),
    # pad each gate block to H_pad, transpose for the MXU, cast weights to bf16.
    scale = jnp.concatenate([jnp.full((H,), 0.5), jnp.full((H,), 0.5),
                             jnp.ones((H,)), jnp.full((H,), 0.5)]).astype(jnp.float32)
    wih = jnp.asarray(w_ih, jnp.float32) * scale[:, None]
    whh = jnp.asarray(w_hh, jnp.float32) * scale[:, None]
    bias = (jnp.asarray(b_ih, jnp.float32) + jnp.asarray(b_hh, jnp.float32)) * scale

    whh = jnp.pad(whh, ((0, 0), (0, H_pad - H)))                          # pad h-in dim
    wih_t = _pad_per_gate(wih, H, H_pad, axis=0).T.astype(jnp.bfloat16)   # (I, 4H_pad)
    whh_t = _pad_per_gate(whh, H, H_pad, axis=0).T.astype(jnp.bfloat16)   # (H_pad, 4H_pad)
    bias_row = _pad_per_gate(bias, H, H_pad, axis=0).reshape(1, 4 * H_pad)

    kernel = functools.partial(
        lstm_chunk_kernel,
        t_valid=T,
        needs_tail_mask=(T_pad != T),
        unroll=(TT if TT <= 8 else 4))

    outputs_p, c_n_p = pl.pallas_call(
        kernel,
        out_shape=(
            jax.ShapeDtypeStruct((T_pad, B_pad, H_pad), out_dtype),
            jax.ShapeDtypeStruct((1, B_pad, H_pad), out_dtype),
        ),
        grid_spec=pltpu.PrefetchScalarGridSpec(
            num_scalar_prefetch=0,
            grid=(nb, n_chunks),
            in_specs=[
                pl.BlockSpec((TT, BT, I), lambda b, n: (n, b, 0)),          # x chunk
                pl.BlockSpec((I, 4 * H_pad), lambda b, n: (0, 0)),          # W_ih^T
                pl.BlockSpec((H_pad, 4 * H_pad), lambda b, n: (0, 0)),      # W_hh^T
                pl.BlockSpec((1, 4 * H_pad), lambda b, n: (0, 0)),          # fused bias
            ],
            out_specs=[
                pl.BlockSpec((TT, BT, H_pad), lambda b, n: (n, b, 0)),      # outputs
                pl.BlockSpec((1, BT, H_pad), lambda b, n: (0, b, 0)),       # c_n
            ],
            scratch_shapes=[
                pltpu.VMEM((TT, BT, 4 * H_pad), jnp.bfloat16),  # precomputed x-gates
                pltpu.VMEM((BT, H_pad), jnp.float32),           # h state
                pltpu.VMEM((BT, H_pad), jnp.float32),           # c state
            ],
        ),
        compiler_params=pltpu.CompilerParams(
            dimension_semantics=("parallel", "arbitrary"),  # batch-parallel, time-recurrent
            vmem_limit_bytes=budget,
        ),
    )(x, wih_t, whh_t, bias_row)

    outputs = outputs_p[:T, :B, :H]
    h_n = outputs[T - 1:T]              # h_n duplicates the last output row (1 layer)
    c_n = c_n_p[:, :B, :H]
    return outputs, (h_n, c_n)


def lstm_reference(input_seqs, w_ih, w_hh, b_ih, b_hh):
    """Pure-JAX f32 reference of the PyTorch single-layer LSTM forward."""
    T, B, I = input_seqs.shape
    H = w_hh.shape[1]
    h = jnp.zeros((B, H), jnp.float32)
    c = jnp.zeros((B, H), jnp.float32)
    bias = b_ih + b_hh
    outs = []
    for t in range(T):
        gates = input_seqs[t] @ w_ih.T + h @ w_hh.T + bias
        i_g = jax.nn.sigmoid(gates[:, 0 * H:1 * H])
        f_g = jax.nn.sigmoid(gates[:, 1 * H:2 * H])
        g_g = jnp.tanh(gates[:, 2 * H:3 * H])
        o_g = jax.nn.sigmoid(gates[:, 3 * H:4 * H])
        c = f_g * c + i_g * g_g
        h = o_g * jnp.tanh(c)
        outs.append(h)
    return jnp.stack(outs, 0), (h[None], c[None])


if __name__ == "__main__":
    # Small shapes consistent with the module: EncoderRNN(input_size=16, hidden_size=32)
    I, H = 16, 32

    key = jax.random.PRNGKey(0)
    k_x1, k_x2, k1, k2, k3, k4 = jax.random.split(key, 6)

    # Deterministic parameter init, mirroring PyTorch's U(-1/sqrt(H), 1/sqrt(H)).
    bound = 1.0 / (H ** 0.5)
    w_ih = jax.random.uniform(k1, (4 * H, I), jnp.float32, -bound, bound)
    w_hh = jax.random.uniform(k2, (4 * H, H), jnp.float32, -bound, bound)
    b_ih = jax.random.uniform(k3, (4 * H,), jnp.float32, -bound, bound)
    b_hh = jax.random.uniform(k4, (4 * H,), jnp.float32, -bound, bound)

    # bf16 MXU operands + bf16 gx scratch -> compare to the f32 reference with
    # loosened tolerances (review note).
    TOL = dict(atol=5e-2, rtol=5e-2)

    # Case 1: even shapes, whole sequence in one auto-sized chunk.
    T1, B1 = 8, 4
    x1 = jax.random.normal(k_x1, (T1, B1, I), jnp.float32)
    out1, (h1, c1) = encoder_rnn_forward(x1, w_ih, w_hh, b_ih, b_hh)
    jax.block_until_ready(out1)
    r_out1, (r_h1, r_c1) = lstm_reference(x1, w_ih, w_hh, b_ih, b_hh)
    assert out1.shape == (T1, B1, H)
    assert h1.shape == (1, B1, H) and c1.shape == (1, B1, H)
    assert jnp.allclose(out1, r_out1, **TOL)
    assert jnp.allclose(h1, r_h1, **TOL)
    assert jnp.allclose(c1, r_c1, **TOL)

    # Case 2: awkward T (padded + tail-masked), multiple time chunks and batch tiles.
    T2, B2 = 11, 12
    x2 = jax.random.normal(k_x2, (T2, B2, I), jnp.float32)
    out2, (h2, c2) = encoder_rnn_forward(x2, w_ih, w_hh, b_ih, b_hh,
                                         time_chunk=4, batch_tile=8)
    jax.block_until_ready(out2)
    r_out2, (r_h2, r_c2) = lstm_reference(x2, w_ih, w_hh, b_ih, b_hh)
    assert out2.shape == (T2, B2, H)
    assert jnp.allclose(out2, r_out2, **TOL)
    assert jnp.allclose(h2, r_h2, **TOL)
    assert jnp.allclose(c2, r_c2, **TOL)

    print("KERNEL_OK")
</pallas_src>

<mosaic_0001>
module attributes {stable_mosaic.version = 11 : i64} {
  func.func @lstm_chunk_kernel(%arg0: i32, %arg1: i32, %arg2: memref<8x8x16xf32, #tpu.memory_space<vmem>>, %arg3: memref<16x512xbf16, #tpu.memory_space<vmem>>, %arg4: memref<128x512xbf16, #tpu.memory_space<vmem>>, %arg5: memref<1x512xf32, #tpu.memory_space<vmem>>, %arg6: memref<8x8x128xf32, #tpu.memory_space<vmem>>, %arg7: memref<1x8x128xf32, #tpu.memory_space<vmem>>, %arg8: memref<8x8x512xbf16, #tpu.memory_space<vmem>>, %arg9: memref<8x128xf32, #tpu.memory_space<vmem>>, %arg10: memref<8x128xf32, #tpu.memory_space<vmem>>) attributes {dimension_semantics = [#tpu.dimension_semantics<parallel>, #tpu.dimension_semantics<arbitrary>], iteration_bounds = array<i64: 1, 1>, scalar_prefetch = 0 : i64, scratch_operands = 3 : i64, tpu.core_type = #tpu.core_type<tc>, window_params = [{transform_indices = @transform_0, window_bounds = array<i64: 8, 8, 16>}, {pipeline_mode = #tpu.pipeline_mode<synchronous>, transform_indices = @transform_1, window_bounds = array<i64: 16, 512>}, {pipeline_mode = #tpu.pipeline_mode<synchronous>, transform_indices = @transform_2, window_bounds = array<i64: 128, 512>}, {pipeline_mode = #tpu.pipeline_mode<synchronous>, transform_indices = @transform_3, window_bounds = array<i64: 1, 512>}, {transform_indices = @transform_4, window_bounds = array<i64: 8, 8, 128>}, {transform_indices = @transform_5, window_bounds = array<i64: 1, 8, 128>}]} {
    %c0_i32 = arith.constant 0 : i32
    %0 = arith.cmpi eq, %arg1, %c0_i32 : i32
    %1 = arith.extui %0 : i1 to i32
    %c0_i32_0 = arith.constant 0 : i32
    %2 = arith.cmpi ne, %1, %c0_i32_0 : i32
    scf.if %2 {
      %cst_167 = arith.constant 0.000000e+00 : f32
      %314 = vector.broadcast %cst_167 : f32 to vector<8x128xf32>
      %c0_168 = arith.constant 0 : index
      %c0_169 = arith.constant 0 : index
      %315 = vector.load %arg9[%c0_168, %c0_169] : memref<8x128xf32, #tpu.memory_space<vmem>>, vector<8x128xf32>
      tpu.vector_store %arg9[%c0_168, %c0_169], %314 {strides = array<i32>} : memref<8x128xf32, #tpu.memory_space<vmem>>, vector<8x128xf32>,
      %cst_170 = arith.constant 0.000000e+00 : f32
      %316 = vector.broadcast %cst_170 : f32 to vector<8x128xf32>
      %c0_171 = arith.constant 0 : index
      %c0_172 = arith.constant 0 : index
      %317 = vector.load %arg10[%c0_171, %c0_172] : memref<8x128xf32, #tpu.memory_space<vmem>>, vector<8x128xf32>
      tpu.vector_store %arg10[%c0_171, %c0_172], %316 {strides = array<i32>} : memref<8x128xf32, #tpu.memory_space<vmem>>, vector<8x128xf32>,
    } else {
    }
    %c0 = arith.constant 0 : index
    %c0_1 = arith.constant 0 : index
    %c0_2 = arith.constant 0 : index
    %3 = vector.load %arg2[%c0, %c0_1, %c0_2] : memref<8x8x16xf32, #tpu.memory_space<vmem>>, vector<8x8x16xf32>
    %4 = vector.shape_cast %3 : vector<8x8x16xf32> to vector<64x16xf32>
    %5 = arith.truncf %4 : vector<64x16xf32> to vector<64x16xbf16>
    %c0_3 = arith.constant 0 : index
    %c0_4 = arith.constant 0 : index
    %6 = vector.load %arg3[%c0_3, %c0_4] : memref<16x512xbf16, #tpu.memory_space<vmem>>, vector<16x512xbf16>
    %cst = arith.constant dense<0.000000e+00> : vector<64x512xf32>
    %7 = tpu.matmul %5, %6, %cst {dimension_numbers = #tpu.dot_dimension_numbers<[1], [0], [0], [1], [0, 0, 1, 1], [], []>} : vector<64x16xbf16>, vector<16x512xbf16>, vector<64x512xf32> -> vector<64x512xf32>
    %c0_5 = arith.constant 0 : index
    %c0_6 = arith.constant 0 : index
    %8 = vector.load %arg5[%c0_5, %c0_6] : memref<1x512xf32, #tpu.memory_space<vmem>>, vector<1x512xf32>
    %9 = vector.broadcast %8 : vector<1x512xf32> to vector<64x512xf32>
    %10 = arith.addf %7, %9 : vector<64x512xf32>
    %11 = vector.shape_cast %10 : vector<64x512xf32> to vector<8x8x512xf32>
    %12 = arith.truncf %11 : vector<8x8x512xf32> to vector<8x8x512xbf16>
    %c0_7 = arith.constant 0 : index
    %c0_8 = arith.constant 0 : index
    %c0_9 = arith.constant 0 : index
    %13 = vector.load %arg8[%c0_7, %c0_8, %c0_9] : memref<8x8x512xbf16, #tpu.memory_space<vmem>>, vector<8x8x512xbf16>
    tpu.vector_store %arg8[%c0_7, %c0_8, %c0_9], %12 {strides = array<i32>} : memref<8x8x512xbf16, #tpu.memory_space<vmem>>, vector<8x8x512xbf16>,
    %c0_10 = arith.constant 0 : index
    %c0_11 = arith.constant 0 : index
    %14 = vector.load %arg4[%c0_10, %c0_11] : memref<128x512xbf16, #tpu.memory_space<vmem>>, vector<128x512xbf16>
    %c0_i32_12 = arith.constant 0 : i32
    %c0_13 = arith.constant 0 : index
    %c0_14 = arith.constant 0 : index
    %15 = vector.load %arg9[%c0_13, %c0_14] : memref<8x128xf32, #tpu.memory_space<vmem>>, vector<8x128xf32>
    %c0_15 = arith.constant 0 : index
    %c0_16 = arith.constant 0 : index
    %16 = vector.load %arg10[%c0_15, %c0_16] : memref<8x128xf32, #tpu.memory_space<vmem>>, vector<8x128xf32>
    %17 = arith.index_cast %c0_i32_12 : i32 to index
    %c0_17 = arith.constant 0 : index
    %c0_18 = arith.constant 0 : index
    %18 = vector.load %arg8[%17, %c0_17, %c0_18] : memref<8x8x512xbf16, #tpu.memory_space<vmem>>, vector<1x8x512xbf16>
    %19 = vector.shape_cast %18 : vector<1x8x512xbf16> to vector<8x512xbf16>
    %20 = arith.extf %19 : vector<8x512xbf16> to vector<8x512xf32>
    %21 = arith.truncf %15 : vector<8x128xf32> to vector<8x128xbf16>
    %cst_19 = arith.constant dense<0.000000e+00> : vector<8x512xf32>
    %22 = tpu.matmul %21, %14, %cst_19 {dimension_numbers = #tpu.dot_dimension_numbers<[1], [0], [0], [1], [0, 0, 1, 1], [], []>} : vector<8x128xbf16>, vector<128x512xbf16>, vector<8x512xf32> -> vector<8x512xf32>
    %23 = arith.addf %20, %22 : vector<8x512xf32>
    %24 = math.tanh %23 : vector<8x512xf32>
    %25 = vector.extract_strided_slice %24 {offsets = [0, 0], sizes = [8, 128], strides = [1, 1]} : vector<8x512xf32> to vector<8x128xf32>
    %cst_20 = arith.constant 5.000000e-01 : f32
    %26 = vector.broadcast %cst_20 : f32 to vector<8x128xf32>
    %27 = arith.mulf %26, %25 : vector<8x128xf32>
    %cst_21 = arith.constant 5.000000e-01 : f32
    %28 = vector.broadcast %cst_21 : f32 to vector<8x128xf32>
    %29 = arith.addf %27, %28 : vector<8x128xf32>
    %30 = vector.extract_strided_slice %24 {offsets = [0, 128], sizes = [8, 128], strides = [1, 1]} : vector<8x512xf32> to vector<8x128xf32>
    %cst_22 = arith.constant 5.000000e-01 : f32
    %31 = vector.broadcast %cst_22 : f32 to vector<8x128xf32>
    %32 = arith.mulf %31, %30 : vector<8x128xf32>
    %cst_23 = arith.constant 5.000000e-01 : f32
    %33 = vector.broadcast %cst_23 : f32 to vector<8x128xf32>
    %34 = arith.addf %32, %33 : vector<8x128xf32>
    %35 = vector.extract_strided_slice %24 {offsets = [0, 256], sizes = [8, 128], strides = [1, 1]} : vector<8x512xf32> to vector<8x128xf32>
    %36 = vector.extract_strided_slice %24 {offsets = [0, 384], sizes = [8, 128], strides = [1, 1]} : vector<8x512xf32> to vector<8x128xf32>
    %cst_24 = arith.constant 5.000000e-01 : f32
    %37 = vector.broadcast %cst_24 : f32 to vector<8x128xf32>
    %38 = arith.mulf %37, %36 : vector<8x128xf32>
    %cst_25 = arith.constant 5.000000e-01 : f32
    %39 = vector.broadcast %cst_25 : f32 to vector<8x128xf32>
    %40 = arith.addf %38, %39 : vector<8x128xf32>
    %41 = arith.mulf %34, %16 : vector<8x128xf32>
    %42 = arith.mulf %29, %35 : vector<8x128xf32>
    %43 = arith.addf %41, %42 : vector<8x128xf32>
    %44 = math.tanh %43 : vector<8x128xf32>
    %45 = arith.mulf %40, %44 : vector<8x128xf32>
    %c0_26 = arith.constant 0 : index
    %c0_27 = arith.constant 0 : index
    %46 = vector.load %arg9[%c0_26, %c0_27] : memref<8x128xf32, #tpu.memory_space<vmem>>, vector<8x128xf32>
    tpu.vector_store %arg9[%c0_26, %c0_27], %45 {strides = array<i32>} : memref<8x128xf32, #tpu.memory_space<vmem>>, vector<8x128xf32>,
    %c0_28 = arith.constant 0 : index
    %c0_29 = arith.constant 0 : index
    %47 = vector.load %arg10[%c0_28, %c0_29] : memref<8x128xf32, #tpu.memory_space<vmem>>, vector<8x128xf32>
    tpu.vector_store %arg10[%c0_28, %c0_29], %43 {strides = array<i32>} : memref<8x128xf32, #tpu.memory_space<vmem>>, vector<8x128xf32>,
    %48 = arith.index_cast %c0_i32_12 : i32 to index
    %c0_30 = arith.constant 0 : index
    %c0_31 = arith.constant 0 : index
    %49 = vector.load %arg6[%48, %c0_30, %c0_31] : memref<8x8x128xf32, #tpu.memory_space<vmem>>, vector<1x8x128xf32>
    %50 = vector.shape_cast %49 : vector<1x8x128xf32> to vector<8x128xf32>
    %51 = vector.shape_cast %45 : vector<8x128xf32> to vector<1x8x128xf32>
    tpu.vector_store %arg6[%48, %c0_30, %c0_31], %51 {strides = array<i32>} : memref<8x8x128xf32, #tpu.memory_space<vmem>>, vector<1x8x128xf32>,
    %c1_i32 = arith.constant 1 : i32
    %c0_32 = arith.constant 0 : index
    %c0_33 = arith.constant 0 : index
    %52 = vector.load %arg9[%c0_32, %c0_33] : memref<8x128xf32, #tpu.memory_space<vmem>>, vector<8x128xf32>
    %c0_34 = arith.constant 0 : index
    %c0_35 = arith.constant 0 : index
    %53 = vector.load %arg10[%c0_34, %c0_35] : memref<8x128xf32, #tpu.memory_space<vmem>>, vector<8x128xf32>
    %54 = arith.index_cast %c1_i32 : i32 to index
    %c0_36 = arith.constant 0 : index
    %c0_37 = arith.constant 0 : index
    %55 = vector.load %arg8[%54, %c0_36, %c0_37] : memref<8x8x512xbf16, #tpu.memory_space<vmem>>, vector<1x8x512xbf16>
    %56 = vector.shape_cast %55 : vector<1x8x512xbf16> to vector<8x512xbf16>
    %57 = arith.extf %56 : vector<8x512xbf16> to vector<8x512xf32>
    %58 = arith.truncf %52 : vector<8x128xf32> to vector<8x128xbf16>
    %cst_38 = arith.constant dense<0.000000e+00> : vector<8x512xf32>
    %59 = tpu.matmul %58, %14, %cst_38 {dimension_numbers = #tpu.dot_dimension_numbers<[1], [0], [0], [1], [0, 0, 1, 1], [], []>} : vector<8x128xbf16>, vector<128x512xbf16>, vector<8x512xf32> -> vector<8x512xf32>
    %60 = arith.addf %57, %59 : vector<8x512xf32>
    %61 = math.tanh %60 : vector<8x512xf32>
    %62 = vector.extract_strided_slice %61 {offsets = [0, 0], sizes = [8, 128], strides = [1, 1]} : vector<8x512xf32> to vector<8x128xf32>
    %cst_39 = arith.constant 5.000000e-01 : f32
    %63 = vector.broadcast %cst_39 : f32 to vector<8x128xf32>
    %64 = arith.mulf %63, %62 : vector<8x128xf32>
    %cst_40 = arith.constant 5.000000e-01 : f32
    %65 = vector.broadcast %cst_40 : f32 to vector<8x128xf32>
    %66 = arith.addf %64, %65 : vector<8x128xf32>
    %67 = vector.extract_strided_slice %61 {offsets = [0, 128], sizes = [8, 128], strides = [1, 1]} : vector<8x512xf32> to vector<8x128xf32>
    %cst_41 = arith.constant 5.000000e-01 : f32
    %68 = vector.broadcast %cst_41 : f32 to vector<8x128xf32>
    %69 = arith.mulf %68, %67 : vector<8x128xf32>
    %cst_42 = arith.constant 5.000000e-01 : f32
    %70 = vector.broadcast %cst_42 : f32 to vector<8x128xf32>
    %71 = arith.addf %69, %70 : vector<8x128xf32>
    %72 = vector.extract_strided_slice %61 {offsets = [0, 256], sizes = [8, 128], strides = [1, 1]} : vector<8x512xf32> to vector<8x128xf32>
    %73 = vector.extract_strided_slice %61 {offsets = [0, 384], sizes = [8, 128], strides = [1, 1]} : vector<8x512xf32> to vector<8x128xf32>
    %cst_43 = arith.constant 5.000000e-01 : f32
    %74 = vector.broadcast %cst_43 : f32 to vector<8x128xf32>
    %75 = arith.mulf %74, %73 : vector<8x128xf32>
    %cst_44 = arith.constant 5.000000e-01 : f32
    %76 = vector.broadcast %cst_44 : f32 to vector<8x128xf32>
    %77 = arith.addf %75, %76 : vector<8x128xf32>
    %78 = arith.mulf %71, %53 : vector<8x128xf32>
    %79 = arith.mulf %66, %72 : vector<8x128xf32>
    %80 = arith.addf %78, %79 : vector<8x128xf32>
    %81 = math.tanh %80 : vector<8x128xf32>
    %82 = arith.mulf %77, %81 : vector<8x128xf32>
    %c0_45 = arith.constant 0 : index
    %c0_46 = arith.constant 0 : index
    %83 = vector.load %arg9[%c0_45, %c0_46] : memref<8x128xf32, #tpu.memory_space<vmem>>, vector<8x128xf32>
    tpu.vector_store %arg9[%c0_45, %c0_46], %82 {strides = array<i32>} : memref<8x128xf32, #tpu.memory_space<vmem>>, vector<8x128xf32>,
    %c0_47 = arith.constant 0 : index
    %c0_48 = arith.constant 0 : index
    %84 = vector.load %arg10[%c0_47, %c0_48] : memref<8x128xf32, #tpu.memory_space<vmem>>, vector<8x128xf32>
    tpu.vector_store %arg10[%c0_47, %c0_48], %80 {strides = array<i32>} : memref<8x128xf32, #tpu.memory_space<vmem>>, vector<8x128xf32>,
    %85 = arith.index_cast %c1_i32 : i32 to index
    %c0_49 = arith.constant 0 : index
    %c0_50 = arith.constant 0 : index
    %86 = vector.load %arg6[%85, %c0_49, %c0_50] : memref<8x8x128xf32, #tpu.memory_space<vmem>>, vector<1x8x128xf32>
    %87 = vector.shape_cast %86 : vector<1x8x128xf32> to vector<8x128xf32>
    %88 = vector.shape_cast %82 : vector<8x128xf32> to vector<1x8x128xf32>
    tpu.vector_store %arg6[%85, %c0_49, %c0_50], %88 {strides = array<i32>} : memref<8x8x128xf32, #tpu.memory_space<vmem>>, vector<1x8x128xf32>,
    %c2_i32 = arith.constant 2 : i32
    %c0_51 = arith.constant 0 : index
    %c0_52 = arith.constant 0 : index
    %89 = vector.load %arg9[%c0_51, %c0_52] : memref<8x128xf32, #tpu.memory_space<vmem>>, vector<8x128xf32>
    %c0_53 = arith.constant 0 : index
    %c0_54 = arith.constant 0 : index
    %90 = vector.load %arg10[%c0_53, %c0_54] : memref<8x128xf32, #tpu.memory_space<vmem>>, vector<8x128xf32>
    %91 = arith.index_cast %c2_i32 : i32 to index
    %c0_55 = arith.constant 0 : index
    %c0_56 = arith.constant 0 : index
    %92 = vector.load %arg8[%91, %c0_55, %c0_56] : memref<8x8x512xbf16, #tpu.memory_space<vmem>>, vector<1x8x512xbf16>
    %93 = vector.shape_cast %92 : vector<1x8x512xbf16> to vector<8x512xbf16>
    %94 = arith.extf %93 : vector<8x512xbf16> to vector<8x512xf32>
    %95 = arith.truncf %89 : vector<8x128xf32> to vector<8x128xbf16>
    %cst_57 = arith.constant dense<0.000000e+00> : vector<8x512xf32>
    %96 = tpu.matmul %95, %14, %cst_57 {dimension_numbers = #tpu.dot_dimension_numbers<[1], [0], [0], [1], [0, 0, 1, 1], [], []>} : vector<8x128xbf16>, vector<128x512xbf16>, vector<8x512xf32> -> vector<8x512xf32>
    %97 = arith.addf %94, %96 : vector<8x512xf32>
    %98 = math.tanh %97 : vector<8x512xf32>
    %99 = vector.extract_strided_slice %98 {offsets = [0, 0], sizes = [8, 128], strides = [1, 1]} : vector<8x512xf32> to vector<8x128xf32>
    %cst_58 = arith.constant 5.000000e-01 : f32
    %100 = vector.broadcast %cst_58 : f32 to vector<8x128xf32>
    %101 = arith.mulf %100, %99 : vector<8x128xf32>
    %cst_59 = arith.constant 5.000000e-01 : f32
    %102 = vector.broadcast %cst_59 : f32 to vector<8x128xf32>
    %103 = arith.addf %101, %102 : vector<8x128xf32>
    %104 = vector.extract_strided_slice %98 {offsets = [0, 128], sizes = [8, 128], strides = [1, 1]} : vector<8x512xf32> to vector<8x128xf32>
    %cst_60 = arith.constant 5.000000e-01 : f32
    %105 = vector.broadcast %cst_60 : f32 to vector<8x128xf32>
    %106 = arith.mulf %105, %104 : vector<8x128xf32>
    %cst_61 = arith.constant 5.000000e-01 : f32
    %107 = vector.broadcast %cst_61 : f32 to vector<8x128xf32>
    %108 = arith.addf %106, %107 : vector<8x128xf32>
    %109 = vector.extract_strided_slice %98 {offsets = [0, 256], sizes = [8, 128], strides = [1, 1]} : vector<8x512xf32> to vector<8x128xf32>
    %110 = vector.extract_strided_slice %98 {offsets = [0, 384], sizes = [8, 128], strides = [1, 1]} : vector<8x512xf32> to vector<8x128xf32>
    %cst_62 = arith.constant 5.000000e-01 : f32
    %111 = vector.broadcast %cst_62 : f32 to vector<8x128xf32>
    %112 = arith.mulf %111, %110 : vector<8x128xf32>
    %cst_63 = arith.constant 5.000000e-01 : f32
    %113 = vector.broadcast %cst_63 : f32 to vector<8x128xf32>
    %114 = arith.addf %112, %113 : vector<8x128xf32>
    %115 = arith.mulf %108, %90 : vector<8x128xf32>
    %116 = arith.mulf %103, %109 : vector<8x128xf32>
    %117 = arith.addf %115, %116 : vector<8x128xf32>
    %118 = math.tanh %117 : vector<8x128xf32>
    %119 = arith.mulf %114, %118 : vector<8x128xf32>
    %c0_64 = arith.constant 0 : index
    %c0_65 = arith.constant 0 : index
    %120 = vector.load %arg9[%c0_64, %c0_65] : memref<8x128xf32, #tpu.memory_space<vmem>>, vector<8x128xf32>
    tpu.vector_store %arg9[%c0_64, %c0_65], %119 {strides = array<i32>} : memref<8x128xf32, #tpu.memory_space<vmem>>, vector<8x128xf32>,
    %c0_66 = arith.constant 0 : index
    %c0_67 = arith.constant 0 : index
    %121 = vector.load %arg10[%c0_66, %c0_67] : memref<8x128xf32, #tpu.memory_space<vmem>>, vector<8x128xf32>
    tpu.vector_store %arg10[%c0_66, %c0_67], %117 {strides = array<i32>} : memref<8x128xf32, #tpu.memory_space<vmem>>, vector<8x128xf32>,
    %122 = arith.index_cast %c2_i32 : i32 to index
    %c0_68 = arith.constant 0 : index
    %c0_69 = arith.constant 0 : index
    %123 = vector.load %arg6[%122, %c0_68, %c0_69] : memref<8x8x128xf32, #tpu.memory_space<vmem>>, vector<1x8x128xf32>
    %124 = vector.shape_cast %123 : vector<1x8x128xf32> to vector<8x128xf32>
    %125 = vector.shape_cast %119 : vector<8x128xf32> to vector<1x8x128xf32>
    tpu.vector_store %arg6[%122, %c0_68, %c0_69], %125 {strides = array<i32>} : memref<8x8x128xf32, #tpu.memory_space<vmem>>, vector<1x8x128xf32>,
    %c3_i32 = arith.constant 3 : i32
    %c0_70 = arith.constant 0 : index
    %c0_71 = arith.constant 0 : index
    %126 = vector.load %arg9[%c0_70, %c0_71] : memref<8x128xf32, #tpu.memory_space<vmem>>, vector<8x128xf32>
    %c0_72 = arith.constant 0 : index
    %c0_73 = arith.constant 0 : index
    %127 = vector.load %arg10[%c0_72, %c0_73] : memref<8x128xf32, #tpu.memory_space<vmem>>, vector<8x128xf32>
    %128 = arith.index_cast %c3_i32 : i32 to index
    %c0_74 = arith.constant 0 : index
    %c0_75 = arith.constant 0 : index
    %129 = vector.load %arg8[%128, %c0_74, %c0_75] : memref<8x8x512xbf16, #tpu.memory_space<vmem>>, vector<1x8x512xbf16>
    %130 = vector.shape_cast %129 : vector<1x8x512xbf16> to vector<8x512xbf16>
    %131 = arith.extf %130 : vector<8x512xbf16> to vector<8x512xf32>
    %132 = arith.truncf %126 : vector<8x128xf32> to vector<8x128xbf16>
    %cst_76 = arith.constant dense<0.000000e+00> : vector<8x512xf32>
    %133 = tpu.matmul %132, %14, %cst_76 {dimension_numbers = #tpu.dot_dimension_numbers<[1], [0], [0], [1], [0, 0, 1, 1], [], []>} : vector<8x128xbf16>, vector<128x512xbf16>, vector<8x512xf32> -> vector<8x512xf32>
    %134 = arith.addf %131, %133 : vector<8x512xf32>
    %135 = math.tanh %134 : vector<8x512xf32>
    %136 = vector.extract_strided_slice %135 {offsets = [0, 0], sizes = [8, 128], strides = [1, 1]} : vector<8x512xf32> to vector<8x128xf32>
    %cst_77 = arith.constant 5.000000e-01 : f32
    %137 = vector.broadcast %cst_77 : f32 to vector<8x128xf32>
    %138 = arith.mulf %137, %136 : vector<8x128xf32>
    %cst_78 = arith.constant 5.000000e-01 : f32
    %139 = vector.broadcast %cst_78 : f32 to vector<8x128xf32>
    %140 = arith.addf %138, %139 : vector<8x128xf32>
    %141 = vector.extract_strided_slice %135 {offsets = [0, 128], sizes = [8, 128], strides = [1, 1]} : vector<8x512xf32> to vector<8x128xf32>
    %cst_79 = arith.constant 5.000000e-01 : f32
    %142 = vector.broadcast %cst_79 : f32 to vector<8x128xf32>
    %143 = arith.mulf %142, %141 : vector<8x128xf32>
    %cst_80 = arith.constant 5.000000e-01 : f32
    %144 = vector.broadcast %cst_80 : f32 to vector<8x128xf32>
    %145 = arith.addf %143, %144 : vector<8x128xf32>
    %146 = vector.extract_strided_slice %135 {offsets = [0, 256], sizes = [8, 128], strides = [1, 1]} : vector<8x512xf32> to vector<8x128xf32>
    %147 = vector.extract_strided_slice %135 {offsets = [0, 384], sizes = [8, 128], strides = [1, 1]} : vector<8x512xf32> to vector<8x128xf32>
    %cst_81 = arith.constant 5.000000e-01 : f32
    %148 = vector.broadcast %cst_81 : f32 to vector<8x128xf32>
    %149 = arith.mulf %148, %147 : vector<8x128xf32>
    %cst_82 = arith.constant 5.000000e-01 : f32
    %150 = vector.broadcast %cst_82 : f32 to vector<8x128xf32>
    %151 = arith.addf %149, %150 : vector<8x128xf32>
    %152 = arith.mulf %145, %127 : vector<8x128xf32>
    %153 = arith.mulf %140, %146 : vector<8x128xf32>
    %154 = arith.addf %152, %153 : vector<8x128xf32>
    %155 = math.tanh %154 : vector<8x128xf32>
    %156 = arith.mulf %151, %155 : vector<8x128xf32>
    %c0_83 = arith.constant 0 : index
    %c0_84 = arith.constant 0 : index
    %157 = vector.load %arg9[%c0_83, %c0_84] : memref<8x128xf32, #tpu.memory_space<vmem>>, vector<8x128xf32>
    tpu.vector_store %arg9[%c0_83, %c0_84], %156 {strides = array<i32>} : memref<8x128xf32, #tpu.memory_space<vmem>>, vector<8x128xf32>,
    %c0_85 = arith.constant 0 : index
    %c0_86 = arith.constant 0 : index
    %158 = vector.load %arg10[%c0_85, %c0_86] : memref<8x128xf32, #tpu.memory_space<vmem>>, vector<8x128xf32>
    tpu.vector_store %arg10[%c0_85, %c0_86], %154 {strides = array<i32>} : memref<8x128xf32, #tpu.memory_space<vmem>>, vector<8x128xf32>,
    %159 = arith.index_cast %c3_i32 : i32 to index
    %c0_87 = arith.constant 0 : index
    %c0_88 = arith.constant 0 : index
    %160 = vector.load %arg6[%159, %c0_87, %c0_88] : memref<8x8x128xf32, #tpu.memory_space<vmem>>, vector<1x8x128xf32>
    %161 = vector.shape_cast %160 : vector<1x8x128xf32> to vector<8x128xf32>
    %162 = vector.shape_cast %156 : vector<8x128xf32> to vector<1x8x128xf32>
    tpu.vector_store %arg6[%159, %c0_87, %c0_88], %162 {strides = array<i32>} : memref<8x8x128xf32, #tpu.memory_space<vmem>>, vector<1x8x128xf32>,
    %c4_i32 = arith.constant 4 : i32
    %c0_89 = arith.constant 0 : index
    %c0_90 = arith.constant 0 : index
    %163 = vector.load %arg9[%c0_89, %c0_90] : memref<8x128xf32, #tpu.memory_space<vmem>>, vector<8x128xf32>
    %c0_91 = arith.constant 0 : index
    %c0_92 = arith.constant 0 : index
    %164 = vector.load %arg10[%c0_91, %c0_92] : memref<8x128xf32, #tpu.memory_space<vmem>>, vector<8x128xf32>
    %165 = arith.index_cast %c4_i32 : i32 to index
    %c0_93 = arith.constant 0 : index
    %c0_94 = arith.constant 0 : index
    %166 = vector.load %arg8[%165, %c0_93, %c0_94] : memref<8x8x512xbf16, #tpu.memory_space<vmem>>, vector<1x8x512xbf16>
    %167 = vector.shape_cast %166 : vector<1x8x512xbf16> to vector<8x512xbf16>
    %168 = arith.extf %167 : vector<8x512xbf16> to vector<8x512xf32>
    %169 = arith.truncf %163 : vector<8x128xf32> to vector<8x128xbf16>
    %cst_95 = arith.constant dense<0.000000e+00> : vector<8x512xf32>
    %170 = tpu.matmul %169, %14, %cst_95 {dimension_numbers = #tpu.dot_dimension_numbers<[1], [0], [0], [1], [0, 0, 1, 1], [], []>} : vector<8x128xbf16>, vector<128x512xbf16>, vector<8x512xf32> -> vector<8x512xf32>
    %171 = arith.addf %168, %170 : vector<8x512xf32>
    %172 = math.tanh %171 : vector<8x512xf32>
    %173 = vector.extract_strided_slice %172 {offsets = [0, 0], sizes = [8, 128], strides = [1, 1]} : vector<8x512xf32> to vector<8x128xf32>
    %cst_96 = arith.constant 5.000000e-01 : f32
    %174 = vector.broadcast %cst_96 : f32 to vector<8x128xf32>
    %175 = arith.mulf %174, %173 : vector<8x128xf32>
    %cst_97 = arith.constant 5.000000e-01 : f32
    %176 = vector.broadcast %cst_97 : f32 to vector<8x128xf32>
    %177 = arith.addf %175, %176 : vector<8x128xf32>
    %178 = vector.extract_strided_slice %172 {offsets = [0, 128], sizes = [8, 128], strides = [1, 1]} : vector<8x512xf32> to vector<8x128xf32>
    %cst_98 = arith.constant 5.000000e-01 : f32
    %179 = vector.broadcast %cst_98 : f32 to vector<8x128xf32>
    %180 = arith.mulf %179, %178 : vector<8x128xf32>
    %cst_99 = arith.constant 5.000000e-01 : f32
    %181 = vector.broadcast %cst_99 : f32 to vector<8x128xf32>
    %182 = arith.addf %180, %181 : vector<8x128xf32>
    %183 = vector.extract_strided_slice %172 {offsets = [0, 256], sizes = [8, 128], strides = [1, 1]} : vector<8x512xf32> to vector<8x128xf32>
    %184 = vector.extract_strided_slice %172 {offsets = [0, 384], sizes = [8, 128], strides = [1, 1]} : vector<8x512xf32> to vector<8x128xf32>
    %cst_100 = arith.constant 5.000000e-01 : f32
    %185 = vector.broadcast %cst_100 : f32 to vector<8x128xf32>
    %186 = arith.mulf %185, %184 : vector<8x128xf32>
    %cst_101 = arith.constant 5.000000e-01 : f32
    %187 = vector.broadcast %cst_101 : f32 to vector<8x128xf32>
    %188 = arith.addf %186, %187 : vector<8x128xf32>
    %189 = arith.mulf %182, %164 : vector<8x128xf32>
    %190 = arith.mulf %177, %183 : vector<8x128xf32>
    %191 = arith.addf %189, %190 : vector<8x128xf32>
    %192 = math.tanh %191 : vector<8x128xf32>
    %193 = arith.mulf %188, %192 : vector<8x128xf32>
    %c0_102 = arith.constant 0 : index
    %c0_103 = arith.constant 0 : index
    %194 = vector.load %arg9[%c0_102, %c0_103] : memref<8x128xf32, #tpu.memory_space<vmem>>, vector<8x128xf32>
    tpu.vector_store %arg9[%c0_102, %c0_103], %193 {strides = array<i32>} : memref<8x128xf32, #tpu.memory_space<vmem>>, vector<8x128xf32>,
    %c0_104 = arith.constant 0 : index
    %c0_105 = arith.constant 0 : index
    %195 = vector.load %arg10[%c0_104, %c0_105] : memref<8x128xf32, #tpu.memory_space<vmem>>, vector<8x128xf32>
    tpu.vector_store %arg10[%c0_104, %c0_105], %191 {strides = array<i32>} : memref<8x128xf32, #tpu.memory_space<vmem>>, vector<8x128xf32>,
    %196 = arith.index_cast %c4_i32 : i32 to index
    %c0_106 = arith.constant 0 : index
    %c0_107 = arith.constant 0 : index
    %197 = vector.load %arg6[%196, %c0_106, %c0_107] : memref<8x8x128xf32, #tpu.memory_space<vmem>>, vector<1x8x128xf32>
    %198 = vector.shape_cast %197 : vector<1x8x128xf32> to vector<8x128xf32>
    %199 = vector.shape_cast %193 : vector<8x128xf32> to vector<1x8x128xf32>
    tpu.vector_store %arg6[%196, %c0_106, %c0_107], %199 {strides = array<i32>} : memref<8x8x128xf32, #tpu.memory_space<vmem>>, vector<1x8x128xf32>,
    %c5_i32 = arith.constant 5 : i32
    %c0_108 = arith.constant 0 : index
    %c0_109 = arith.constant 0 : index
    %200 = vector.load %arg9[%c0_108, %c0_109] : memref<8x128xf32, #tpu.memory_space<vmem>>, vector<8x128xf32>
    %c0_110 = arith.constant 0 : index
    %c0_111 = arith.constant 0 : index
    %201 = vector.load %arg10[%c0_110, %c0_111] : memref<8x128xf32, #tpu.memory_space<vmem>>, vector<8x128xf32>
    %202 = arith.index_cast %c5_i32 : i32 to index
    %c0_112 = arith.constant 0 : index
    %c0_113 = arith.constant 0 : index
    %203 = vector.load %arg8[%202, %c0_112, %c0_113] : memref<8x8x512xbf16, #tpu.memory_space<vmem>>, vector<1x8x512xbf16>
    %204 = vector.shape_cast %203 : vector<1x8x512xbf16> to vector<8x512xbf16>
    %205 = arith.extf %204 : vector<8x512xbf16> to vector<8x512xf32>
    %206 = arith.truncf %200 : vector<8x128xf32> to vector<8x128xbf16>
    %cst_114 = arith.constant dense<0.000000e+00> : vector<8x512xf32>
    %207 = tpu.matmul %206, %14, %cst_114 {dimension_numbers = #tpu.dot_dimension_numbers<[1], [0], [0], [1], [0, 0, 1, 1], [], []>} : vector<8x128xbf16>, vector<128x512xbf16>, vector<8x512xf32> -> vector<8x512xf32>
    %208 = arith.addf %205, %207 : vector<8x512xf32>
    %209 = math.tanh %208 : vector<8x512xf32>
    %210 = vector.extract_strided_slice %209 {offsets = [0, 0], sizes = [8, 128], strides = [1, 1]} : vector<8x512xf32> to vector<8x128xf32>
    %cst_115 = arith.constant 5.000000e-01 : f32
    %211 = vector.broadcast %cst_115 : f32 to vector<8x128xf32>
    %212 = arith.mulf %211, %210 : vector<8x128xf32>
    %cst_116 = arith.constant 5.000000e-01 : f32
    %213 = vector.broadcast %cst_116 : f32 to vector<8x128xf32>
    %214 = arith.addf %212, %213 : vector<8x128xf32>
    %215 = vector.extract_strided_slice %209 {offsets = [0, 128], sizes = [8, 128], strides = [1, 1]} : vector<8x512xf32> to vector<8x128xf32>
    %cst_117 = arith.constant 5.000000e-01 : f32
    %216 = vector.broadcast %cst_117 : f32 to vector<8x128xf32>
    %217 = arith.mulf %216, %215 : vector<8x128xf32>
    %cst_118 = arith.constant 5.000000e-01 : f32
    %218 = vector.broadcast %cst_118 : f32 to vector<8x128xf32>
    %219 = arith.addf %217, %218 : vector<8x128xf32>
    %220 = vector.extract_strided_slice %209 {offsets = [0, 256], sizes = [8, 128], strides = [1, 1]} : vector<8x512xf32> to vector<8x128xf32>
    %221 = vector.extract_strided_slice %209 {offsets = [0, 384], sizes = [8, 128], strides = [1, 1]} : vector<8x512xf32> to vector<8x128xf32>
    %cst_119 = arith.constant 5.000000e-01 : f32
    %222 = vector.broadcast %cst_119 : f32 to vector<8x128xf32>
    %223 = arith.mulf %222, %221 : vector<8x128xf32>
    %cst_120 = arith.constant 5.000000e-01 : f32
    %224 = vector.broadcast %cst_120 : f32 to vector<8x128xf32>
    %225 = arith.addf %223, %224 : vector<8x128xf32>
    %226 = arith.mulf %219, %201 : vector<8x128xf32>
    %227 = arith.mulf %214, %220 : vector<8x128xf32>
    %228 = arith.addf %226, %227 : vector<8x128xf32>
    %229 = math.tanh %228 : vector<8x128xf32>
    %230 = arith.mulf %225, %229 : vector<8x128xf32>
    %c0_121 = arith.constant 0 : index
    %c0_122 = arith.constant 0 : index
    %231 = vector.load %arg9[%c0_121, %c0_122] : memref<8x128xf32, #tpu.memory_space<vmem>>, vector<8x128xf32>
    tpu.vector_store %arg9[%c0_121, %c0_122], %230 {strides = array<i32>} : memref<8x128xf32, #tpu.memory_space<vmem>>, vector<8x128xf32>,
    %c0_123 = arith.constant 0 : index
    %c0_124 = arith.constant 0 : index
    %232 = vector.load %arg10[%c0_123, %c0_124] : memref<8x128xf32, #tpu.memory_space<vmem>>, vector<8x128xf32>
    tpu.vector_store %arg10[%c0_123, %c0_124], %228 {strides = array<i32>} : memref<8x128xf32, #tpu.memory_space<vmem>>, vector<8x128xf32>,
    %233 = arith.index_cast %c5_i32 : i32 to index
    %c0_125 = arith.constant 0 : index
    %c0_126 = arith.constant 0 : index
    %234 = vector.load %arg6[%233, %c0_125, %c0_126] : memref<8x8x128xf32, #tpu.memory_space<vmem>>, vector<1x8x128xf32>
    %235 = vector.shape_cast %234 : vector<1x8x128xf32> to vector<8x128xf32>
    %236 = vector.shape_cast %230 : vector<8x128xf32> to vector<1x8x128xf32>
    tpu.vector_store %arg6[%233, %c0_125, %c0_126], %236 {strides = array<i32>} : memref<8x8x128xf32, #tpu.memory_space<vmem>>, vector<1x8x128xf32>,
    %c6_i32 = arith.constant 6 : i32
    %c0_127 = arith.constant 0 : index
    %c0_128 = arith.constant 0 : index
    %237 = vector.load %arg9[%c0_127, %c0_128] : memref<8x128xf32, #tpu.memory_space<vmem>>, vector<8x128xf32>
    %c0_129 = arith.constant 0 : index
    %c0_130 = arith.constant 0 : index
    %238 = vector.load %arg10[%c0_129, %c0_130] : memref<8x128xf32, #tpu.memory_space<vmem>>, vector<8x128xf32>
    %239 = arith.index_cast %c6_i32 : i32 to index
    %c0_131 = arith.constant 0 : index
    %c0_132 = arith.constant 0 : index
    %240 = vector.load %arg8[%239, %c0_131, %c0_132] : memref<8x8x512xbf16, #tpu.memory_space<vmem>>, vector<1x8x512xbf16>
    %241 = vector.shape_cast %240 : vector<1x8x512xbf16> to vector<8x512xbf16>
    %242 = arith.extf %241 : vector<8x512xbf16> to vector<8x512xf32>
    %243 = arith.truncf %237 : vector<8x128xf32> to vector<8x128xbf16>
    %cst_133 = arith.constant dense<0.000000e+00> : vector<8x512xf32>
    %244 = tpu.matmul %243, %14, %cst_133 {dimension_numbers = #tpu.dot_dimension_numbers<[1], [0], [0], [1], [0, 0, 1, 1], [], []>} : vector<8x128xbf16>, vector<128x512xbf16>, vector<8x512xf32> -> vector<8x512xf32>
    %245 = arith.addf %242, %244 : vector<8x512xf32>
    %246 = math.tanh %245 : vector<8x512xf32>
    %247 = vector.extract_strided_slice %246 {offsets = [0, 0], sizes = [8, 128], strides = [1, 1]} : vector<8x512xf32> to vector<8x128xf32>
    %cst_134 = arith.constant 5.000000e-01 : f32
    %248 = vector.broadcast %cst_134 : f32 to vector<8x128xf32>
    %249 = arith.mulf %248, %247 : vector<8x128xf32>
    %cst_135 = arith.constant 5.000000e-01 : f32
    %250 = vector.broadcast %cst_135 : f32 to vector<8x128xf32>
    %251 = arith.addf %249, %250 : vector<8x128xf32>
    %252 = vector.extract_strided_slice %246 {offsets = [0, 128], sizes = [8, 128], strides = [1, 1]} : vector<8x512xf32> to vector<8x128xf32>
    %cst_136 = arith.constant 5.000000e-01 : f32
    %253 = vector.broadcast %cst_136 : f32 to vector<8x128xf32>
    %254 = arith.mulf %253, %252 : vector<8x128xf32>
    %cst_137 = arith.constant 5.000000e-01 : f32
    %255 = vector.broadcast %cst_137 : f32 to vector<8x128xf32>
    %256 = arith.addf %254, %255 : vector<8x128xf32>
    %257 = vector.extract_strided_slice %246 {offsets = [0, 256], sizes = [8, 128], strides = [1, 1]} : vector<8x512xf32> to vector<8x128xf32>
    %258 = vector.extract_strided_slice %246 {offsets = [0, 384], sizes = [8, 128], strides = [1, 1]} : vector<8x512xf32> to vector<8x128xf32>
    %cst_138 = arith.constant 5.000000e-01 : f32
    %259 = vector.broadcast %cst_138 : f32 to vector<8x128xf32>
    %260 = arith.mulf %259, %258 : vector<8x128xf32>
    %cst_139 = arith.constant 5.000000e-01 : f32
    %261 = vector.broadcast %cst_139 : f32 to vector<8x128xf32>
    %262 = arith.addf %260, %261 : vector<8x128xf32>
    %263 = arith.mulf %256, %238 : vector<8x128xf32>
    %264 = arith.mulf %251, %257 : vector<8x128xf32>
    %265 = arith.addf %263, %264 : vector<8x128xf32>
    %266 = math.tanh %265 : vector<8x128xf32>
    %267 = arith.mulf %262, %266 : vector<8x128xf32>
    %c0_140 = arith.constant 0 : index
    %c0_141 = arith.constant 0 : index
    %268 = vector.load %arg9[%c0_140, %c0_141] : memref<8x128xf32, #tpu.memory_space<vmem>>, vector<8x128xf32>
    tpu.vector_store %arg9[%c0_140, %c0_141], %267 {strides = array<i32>} : memref<8x128xf32, #tpu.memory_space<vmem>>, vector<8x128xf32>,
    %c0_142 = arith.constant 0 : index
    %c0_143 = arith.constant 0 : index
    %269 = vector.load %arg10[%c0_142, %c0_143] : memref<8x128xf32, #tpu.memory_space<vmem>>, vector<8x128xf32>
    tpu.vector_store %arg10[%c0_142, %c0_143], %265 {strides = array<i32>} : memref<8x128xf32, #tpu.memory_space<vmem>>, vector<8x128xf32>,
    %270 = arith.index_cast %c6_i32 : i32 to index
    %c0_144 = arith.constant 0 : index
    %c0_145 = arith.constant 0 : index
    %271 = vector.load %arg6[%270, %c0_144, %c0_145] : memref<8x8x128xf32, #tpu.memory_space<vmem>>, vector<1x8x128xf32>
    %272 = vector.shape_cast %271 : vector<1x8x128xf32> to vector<8x128xf32>
    %273 = vector.shape_cast %267 : vector<8x128xf32> to vector<1x8x128xf32>
    tpu.vector_store %arg6[%270, %c0_144, %c0_145], %273 {strides = array<i32>} : memref<8x8x128xf32, #tpu.memory_space<vmem>>, vector<1x8x128xf32>,
    %c7_i32 = arith.constant 7 : i32
    %c0_146 = arith.constant 0 : index
    %c0_147 = arith.constant 0 : index
    %274 = vector.load %arg9[%c0_146, %c0_147] : memref<8x128xf32, #tpu.memory_space<vmem>>, vector<8x128xf32>
    %c0_148 = arith.constant 0 : index
    %c0_149 = arith.constant 0 : index
    %275 = vector.load %arg10[%c0_148, %c0_149] : memref<8x128xf32, #tpu.memory_space<vmem>>, vector<8x128xf32>
    %276 = arith.index_cast %c7_i32 : i32 to index
    %c0_150 = arith.constant 0 : index
    %c0_151 = arith.constant 0 : index
    %277 = vector.load %arg8[%276, %c0_150, %c0_151] : memref<8x8x512xbf16, #tpu.memory_space<vmem>>, vector<1x8x512xbf16>
    %278 = vector.shape_cast %277 : vector<1x8x512xbf16> to vector<8x512xbf16>
    %279 = arith.extf %278 : vector<8x512xbf16> to vector<8x512xf32>
    %280 = arith.truncf %274 : vector<8x128xf32> to vector<8x128xbf16>
    %cst_152 = arith.constant dense<0.000000e+00> : vector<8x512xf32>
    %281 = tpu.matmul %280, %14, %cst_152 {dimension_numbers = #tpu.dot_dimension_numbers<[1], [0], [0], [1], [0, 0, 1, 1], [], []>} : vector<8x128xbf16>, vector<128x512xbf16>, vector<8x512xf32> -> vector<8x512xf32>
    %282 = arith.addf %279, %281 : vector<8x512xf32>
    %283 = math.tanh %282 : vector<8x512xf32>
    %284 = vector.extract_strided_slice %283 {offsets = [0, 0], sizes = [8, 128], strides = [1, 1]} : vector<8x512xf32> to vector<8x128xf32>
    %cst_153 = arith.constant 5.000000e-01 : f32
    %285 = vector.broadcast %cst_153 : f32 to vector<8x128xf32>
    %286 = arith.mulf %285, %284 : vector<8x128xf32>
    %cst_154 = arith.constant 5.000000e-01 : f32
    %287 = vector.broadcast %cst_154 : f32 to vector<8x128xf32>
    %288 = arith.addf %286, %287 : vector<8x128xf32>
    %289 = vector.extract_strided_slice %283 {offsets = [0, 128], sizes = [8, 128], strides = [1, 1]} : vector<8x512xf32> to vector<8x128xf32>
    %cst_155 = arith.constant 5.000000e-01 : f32
    %290 = vector.broadcast %cst_155 : f32 to vector<8x128xf32>
    %291 = arith.mulf %290, %289 : vector<8x128xf32>
    %cst_156 = arith.constant 5.000000e-01 : f32
    %292 = vector.broadcast %cst_156 : f32 to vector<8x128xf32>
    %293 = arith.addf %291, %292 : vector<8x128xf32>
    %294 = vector.extract_strided_slice %283 {offsets = [0, 256], sizes = [8, 128], strides = [1, 1]} : vector<8x512xf32> to vector<8x128xf32>
    %295 = vector.extract_strided_slice %283 {offsets = [0, 384], sizes = [8, 128], strides = [1, 1]} : vector<8x512xf32> to vector<8x128xf32>
    %cst_157 = arith.constant 5.000000e-01 : f32
    %296 = vector.broadcast %cst_157 : f32 to vector<8x128xf32>
    %297 = arith.mulf %296, %295 : vector<8x128xf32>
    %cst_158 = arith.constant 5.000000e-01 : f32
    %298 = vector.broadcast %cst_158 : f32 to vector<8x128xf32>
    %299 = arith.addf %297, %298 : vector<8x128xf32>
    %300 = arith.mulf %293, %275 : vector<8x128xf32>
    %301 = arith.mulf %288, %294 : vector<8x128xf32>
    %302 = arith.addf %300, %301 : vector<8x128xf32>
    %303 = math.tanh %302 : vector<8x128xf32>
    %304 = arith.mulf %299, %303 : vector<8x128xf32>
    %c0_159 = arith.constant 0 : index
    %c0_160 = arith.constant 0 : index
    %305 = vector.load %arg9[%c0_159, %c0_160] : memref<8x128xf32, #tpu.memory_space<vmem>>, vector<8x128xf32>
    tpu.vector_store %arg9[%c0_159, %c0_160], %304 {strides = array<i32>} : memref<8x128xf32, #tpu.memory_space<vmem>>, vector<8x128xf32>,
    %c0_161 = arith.constant 0 : index
    %c0_162 = arith.constant 0 : index
    %306 = vector.load %arg10[%c0_161, %c0_162] : memref<8x128xf32, #tpu.memory_space<vmem>>, vector<8x128xf32>
    tpu.vector_store %arg10[%c0_161, %c0_162], %302 {strides = array<i32>} : memref<8x128xf32, #tpu.memory_space<vmem>>, vector<8x128xf32>,
    %307 = arith.index_cast %c7_i32 : i32 to index
    %c0_163 = arith.constant 0 : index
    %c0_164 = arith.constant 0 : index
    %308 = vector.load %arg6[%307, %c0_163, %c0_164] : memref<8x8x128xf32, #tpu.memory_space<vmem>>, vector<1x8x128xf32>
    %309 = vector.shape_cast %308 : vector<1x8x128xf32> to vector<8x128xf32>
    %310 = vector.shape_cast %304 : vector<8x128xf32> to vector<1x8x128xf32>
    tpu.vector_store %arg6[%307, %c0_163, %c0_164], %310 {strides = array<i32>} : memref<8x8x128xf32, #tpu.memory_space<vmem>>, vector<1x8x128xf32>,
    %c8_i32 = arith.constant 8 : i32
    %c0_i32_165 = arith.constant 0 : i32
    %311 = arith.cmpi eq, %arg1, %c0_i32_165 : i32
    %312 = arith.extui %311 : i1 to i32
    %c0_i32_166 = arith.constant 0 : i32
    %313 = arith.cmpi ne, %312, %c0_i32_166 : i32
    scf.if %313 {
      %c0_167 = arith.constant 0 : index
      %c0_168 = arith.constant 0 : index
      %314 = vector.load %arg10[%c0_167, %c0_168] : memref<8x128xf32, #tpu.memory_space<vmem>>, vector<8x128xf32>
      %c0_169 = arith.constant 0 : index
      %c0_170 = arith.constant 0 : index
      %c0_171 = arith.constant 0 : index
      %315 = vector.load %arg7[%c0_169, %c0_170, %c0_171] : memref<1x8x128xf32, #tpu.memory_space<vmem>>, vector<1x8x128xf32>
      %316 = vector.shape_cast %315 : vector<1x8x128xf32> to vector<8x128xf32>
      %317 = vector.shape_cast %314 : vector<8x128xf32> to vector<1x8x128xf32>
      tpu.vector_store %arg7[%c0_169, %c0_170, %c0_171], %317 {strides = array<i32>} : memref<1x8x128xf32, #tpu.memory_space<vmem>>, vector<1x8x128xf32>,
    } else {
    }
    return
  }
  func.func @transform_0(%arg0: i32, %arg1: i32) -> (i32, i32, i32) {
    %c0_i32 = arith.constant 0 : i32
    %c0_i32_0 = arith.constant 0 : i32
    return %arg1, %arg0, %c0_i32 : i32, i32, i32
  }
  func.func @transform_1(%arg0: i32, %arg1: i32) -> (i32, i32) {
    %c0_i32 = arith.constant 0 : i32
    %c0_i32_0 = arith.constant 0 : i32
    %c0_i32_1 = arith.constant 0 : i32
    return %c0_i32, %c0_i32_0 : i32, i32
  }
  func.func @transform_2(%arg0: i32, %arg1: i32) -> (i32, i32) {
    %c0_i32 = arith.constant 0 : i32
    %c0_i32_0 = arith.constant 0 : i32
    %c0_i32_1 = arith.constant 0 : i32
    return %c0_i32, %c0_i32_0 : i32, i32
  }
  func.func @transform_3(%arg0: i32, %arg1: i32) -> (i32, i32) {
    %c0_i32 = arith.constant 0 : i32
    %c0_i32_0 = arith.constant 0 : i32
    %c0_i32_1 = arith.constant 0 : i32
    return %c0_i32, %c0_i32_0 : i32, i32
  }
  func.func @transform_4(%arg0: i32, %arg1: i32) -> (i32, i32, i32) {
    %c0_i32 = arith.constant 0 : i32
    %c0_i32_0 = arith.constant 0 : i32
    return %arg1, %arg0, %c0_i32 : i32, i32, i32
  }
  func.func @transform_5(%arg0: i32, %arg1: i32) -> (i32, i32, i32) {
    %c0_i32 = arith.constant 0 : i32
    %c0_i32_0 = arith.constant 0 : i32
    %c0_i32_1 = arith.constant 0 : i32
    return %c0_i32, %arg0, %c0_i32_0 : i32, i32, i32
  }
}

</mosaic_0001>

<llo_original>
// kernel: tpu_custom_call.1
$region0: #{tpu_custom_call.1}
  #allocation0 [shape = 'u32[]', space=smem, size = 0x4, offset = 0x4, fixed_abs, tag = 'smem constant byte address 0x4 - core index']
  #allocation1 [shape = 'u32[144,128]{1,0:T(1,128)}', space=vmem, size = 0x12000, scoped, tag = 'internal scratch']
  #allocation2 [shape = 'bf16[8,8,512]{2,1,0:T(8,128)(2,1)}', space=vmem, size = 0x10000, scoped, tag = 'scratch operand']
  #allocation3 [shape = 'f32[8,128]{1,0:T(8,128)}', space=vmem, size = 0x1000, scoped, tag = 'scratch operand']
  #allocation4 [shape = 'f32[8,128]{1,0:T(8,128)}', space=vmem, size = 0x1000, scoped, tag = 'scratch operand']
  %s0 = inlined_call_operand.hbm [shape: f32[8,8,16], index: 0, kind: input, shape index: {}]
  %s1 = inlined_call_operand.hbm [shape: bf16[16,512], index: 1, kind: input, shape index: {}]
  %s2 = inlined_call_operand.hbm [shape: bf16[128,512], index: 2, kind: input, shape index: {}]
  %s3 = inlined_call_operand.vmem [shape: f32[1,512], index: 3, kind: input, shape index: {}]
  %s4 = inlined_call_operand.hbm [shape: f32[8,8,128], index: 4, kind: output, shape index: {0}]
  %s5 = inlined_call_operand.hbm [shape: f32[1,8,128], index: 5, kind: output, shape index: {1}]
  %6 = xla_tuple %s4, %s5
  %s7 = sld [smem:[#allocation0]]
  $region54: #{tpu_custom_call.1} parent=0
    _
  %s9 = ssub.s32 1, %s7
  %s10 = scalar_select 0, %s9, %s7
  $region1: #{tpu_custom_call.1} parent=0
    #allocation5 [shape = 'u8[32768]{0}', space=vmem, size = 0x8000, scoped, tag = 'input window, operand 0, single buffered']
    #allocation6 [shape = 's32[1]{0}', space=sflag, size = 0x4, scoped, tag = 'scoped memory for tpu_custom_call.1']
    #allocation7 [shape = 's32[1]{0}', space=sflag, size = 0x4, scoped, tag = 'scoped memory for tpu_custom_call.1']
    #allocation8 [shape = 'u8[16384]{0}', space=vmem, size = 0x4000, scoped, tag = 'input window, operand 1, single buffered']
    #allocation9 [shape = 's32[1]{0}', space=sflag, size = 0x4, scoped, tag = 'scoped memory for tpu_custom_call.1']
    #allocation10 [shape = 'u8[131072]{0}', space=vmem, size = 0x20000, scoped, tag = 'input window, operand 2, single buffered']
    #allocation11 [shape = 'u8[32768]{0}', space=vmem, size = 0x8000, scoped, tag = 'output window, operand 0, single buffered']
    #allocation12 [shape = 'u8[4096]{0}', space=vmem, size = 0x1000, scoped, tag = 'output window, operand 1, single buffered']
    #allocation13 [shape = 's32[1]{0}', space=sflag, size = 0x4, scoped, tag = 'scoped memory for tpu_custom_call.1']
    %11 = vsyncpa [#allocation6], 0
    %12 = vsyncpa [#allocation9], 0
    %13 = vsyncpa [#allocation7], 0
    %14 = vsyncpa [#allocation13], 0
    // Predicated region
    $region2: #{tpu_custom_call.1} parent=1 // pred_check
      _
    $region3: #{tpu_custom_call.1} parent=1 // pred_check_branch
      %16 = sbr.rel (0) target = $region5
    $region4: #{tpu_custom_call.1} parent=1 // pred_region
      %s18 = ssub.s32 1024, 1024
      %19 = vsyncadd [#allocation6], %s18
      %s20 = sshll.u32 [#allocation5], 4
      %s21 = int_to_ptr.vmem [resolvable:$true] %s20
      %26 = dma.hbm_to_vmem [thread:$0]  %s0, 1024, %s21, [#allocation6], 128, 128, 8
    $region5: #{tpu_custom_call.1} parent=1 // pred_fallthru
      _
    // Predicated region
    $region6: #{tpu_custom_call.1} parent=1 // pred_check
      _
    $region7: #{tpu_custom_call.1} parent=1 // pred_check_branch
      %28 = sbr.rel (0) target = $region9
    $region8: #{tpu_custom_call.1} parent=1 // pred_region
      %s30 = ssub.s32 512, 512
      %31 = vsyncadd [#allocation9], %s30
      %s32 = sshll.u32 [#allocation8], 4
      %s33 = int_to_ptr.vmem [resolvable:$true] %s32
      %38 = dma.hbm_to_vmem [thread:$0]  %s1, 512, %s33, [#allocation9], 256, 256, 16
    $region9: #{tpu_custom_call.1} parent=1 // pred_fallthru
      _
    // Predicated region
    $region10: #{tpu_custom_call.1} parent=1 // pred_check
      _
    $region11: #{tpu_custom_call.1} parent=1 // pred_check_branch
      %40 = sbr.rel (0) target = $region13
    $region12: #{tpu_custom_call.1} parent=1 // pred_region
      %s42 = ssub.s32 4096, 4096
      %43 = vsyncadd [#allocation9], %s42
      %s44 = sshll.u32 [#allocation10], 4
      %s45 = int_to_ptr.vmem [resolvable:$true] %s44
      %50 = dma.hbm_to_vmem [thread:$0]  %s2, 4096, %s45, [#allocation9], 256, 256, 16
    $region13: #{tpu_custom_call.1} parent=1 // pred_fallthru
      _
    // Predicated region
    $region14: #{tpu_custom_call.1} parent=1 // pred_check
      _
    $region15: #{tpu_custom_call.1} parent=1 // pred_check_branch
      %52 = sbr.rel (0) target = $region17
    $region16: #{tpu_custom_call.1} parent=1 // pred_region
      _
    $region17: #{tpu_custom_call.1} parent=1 // pred_fallthru
      _
    // Predicated region
    $region18: #{tpu_custom_call.1} parent=1 // pred_check
      _
    $region19: #{tpu_custom_call.1} parent=1 // pred_check_branch
      %54 = sbr.rel (0) target = $region21
    $region20: #{tpu_custom_call.1} parent=1 // pred_region
      %55 = dma.done [#allocation6], 1024
    $region21: #{tpu_custom_call.1} parent=1 // pred_fallthru
      _
    // Predicated region
    $region22: #{tpu_custom_call.1} parent=1 // pred_check
      _
    $region23: #{tpu_custom_call.1} parent=1 // pred_check_branch
      %57 = sbr.rel (0) target = $region25
    $region24: #{tpu_custom_call.1} parent=1 // pred_region
      %58 = dma.done [#allocation9], 512
    $region25: #{tpu_custom_call.1} parent=1 // pred_fallthru
      _
    // Predicated region
    $region26: #{tpu_custom_call.1} parent=1 // pred_check
      _
    $region27: #{tpu_custom_call.1} parent=1 // pred_check_branch
      %60 = sbr.rel (0) target = $region29
    $region28: #{tpu_custom_call.1} parent=1 // pred_region
      %61 = dma.done [#allocation9], 4096
    $region29: #{tpu_custom_call.1} parent=1 // pred_fallthru
      _
    %p63 = scmp.eq.s32.totalorder 0, 0
    // Predicated region
    $region30: #{tpu_custom_call.1} parent=1 // pred_check
      %p64 = pneg %p63
    $region31: #{tpu_custom_call.1} parent=1 // pred_check_branch
      %66 = sbr.rel (%p64) target = $region33
    $region32: #{tpu_custom_call.1} parent=1 // pred_region
      %67 = vst [vmem:[#allocation3] sm:$0xff] 0.0
      %68 = vst [vmem:[#allocation4] sm:$0xff] 0.0
    $region33: #{tpu_custom_call.1} parent=1 // pred_fallthru
      _
    %v69 = vld [vmem:[#allocation5] sm:$0xff]
    %v70 = vld [vmem:[#allocation5 + $0x8] sm:$0xff]
    %v71 = vld [vmem:[#allocation5 + $0x10] sm:$0xff]
    %v72 = vld [vmem:[#allocation5 + $0x18] sm:$0xff]
    %v73 = vld [vmem:[#allocation5 + $0x20] sm:$0xff]
    %v74 = vld [vmem:[#allocation5 + $0x28] sm:$0xff]
    %v75 = vld [vmem:[#allocation5 + $0x30] sm:$0xff]
    %v76 = vld [vmem:[#allocation5 + $0x38] sm:$0xff]
    %v77 = vpack.c.bf16 %v70, %v69
    %v78 = vpack.c.bf16 %v72, %v71
    %v79 = vpack.c.bf16 %v74, %v73
    %v80 = vpack.c.bf16 %v76, %v75
    %v81 = vld [vmem:[#allocation8] sm:$0xff]
    %v82 = vld [vmem:[#allocation8 + $0x8] sm:$0xff]
    %v83 = vld [vmem:[#allocation8 + $0x10] sm:$0xff]
    %v84 = vld [vmem:[#allocation8 + $0x18] sm:$0xff]
    %v85 = vld [vmem:[%s3] sm:$0xf]
    %v87 = vlaneseq
    %v88 = vshrl.u32 %v87, 7
    %v89 = vsub.s32 0, %v88
    %v90 = vrot.slane %v85, %v89
    %v91 = vlaneseq
    %v92 = vshrl.u32 %v91, 7
    %v93 = vsub.s32 1, %v92
    %v94 = vrot.slane %v85, %v93
    %v95 = vlaneseq
    %v96 = vshrl.u32 %v95, 7
    %v97 = vsub.s32 2, %v96
    %v98 = vrot.slane %v85, %v97
    %v99 = vlaneseq
    %v100 = vshrl.u32 %v99, 7
    %v101 = vsub.s32 3, %v100
    %v102 = vrot.slane %v85, %v101
    %v111 = vunpack.c.l.b16 %v81
    %v112 = vunpack.c.h.b16 %v81
    %v113 = vunpack.c.l.b16 %v82
    %v114 = vunpack.c.h.b16 %v82
    %v115 = vunpack.c.l.b16 %v83
    %v116 = vunpack.c.h.b16 %v83
    %v117 = vunpack.c.l.b16 %v84
    %v118 = vunpack.c.h.b16 %v84
    %v119 = vpack.c.b16 %v115, %v111
    %v120 = vpack.c.b16 %v116, %v112
    %v121 = vpack.c.b16 %v117, %v113
    %v122 = vpack.c.b16 %v118, %v114
    %vm127 = vcmask 130048
    %v129 = vsel %vm127, %v77, 0
    %v132 = vsel %vm127, %v78, 0
    %v135 = vsel %vm127, %v79, 0
    %v138 = vsel %vm127, %v80, 0
    %140 = vmatprep.subr.bf16.mxu0 0
    %141 = vmatpush1.bf16.msra.mxu0 0
    %142 = vmatprep.subr.bf16.mxu0 0
    %143 = vmatpush1.bf16.msra.mxu0 0
    %144 = vmatprep.subr.bf16.mxu0 0
    %145 = vmatpush1.bf16.msra.mxu0 0
    %146 = vmatprep.subr.bf16.mxu0 0
    %147 = vmatpush1.bf16.msra.mxu0 0
    %148 = vmatprep.subr.bf16.mxu0 0
    %149 = vmatpush1.bf16.msra.mxu0 0
    %150 = vmatprep.subr.bf16.mxu0 0
    %151 = vmatpush1.bf16.msra.mxu0 0
    %152 = vmatprep.subr.bf16.mxu0 0
    %153 = vmatpush1.bf16.msra.mxu0 0
    %154 = vmatprep.subr.bf16.mxu0 %v120
    %155 = vmatpush1.bf16.msra.mxu0 %v119
    %156 = vmatprep.subr.bf16.mxu0 0
    %157 = vmatpush2.bf16.msra.mxu0 0
    %158 = vmatprep.subr.bf16.mxu0 0
    %159 = vmatpush2.bf16.msra.mxu0 0
    %160 = vmatprep.subr.bf16.mxu0 0
    %161 = vmatpush2.bf16.msra.mxu0 0
    %162 = vmatprep.subr.bf16.mxu0 0
    %163 = vmatpush2.bf16.msra.mxu0 0
    %164 = vmatprep.subr.bf16.mxu0 0
    %165 = vmatpush2.bf16.msra.mxu0 0
    %166 = vmatprep.subr.bf16.mxu0 0
    %167 = vmatpush2.bf16.msra.mxu0 0
    %168 = vmatprep.subr.bf16.mxu0 0
    %169 = vmatpush2.bf16.msra.mxu0 0
    %170 = vmatprep.subr.bf16.mxu0 0
    %171 = vmatpush2.bf16.msra.mxu0 0
    %172 = vmatprep.mubr.bf16.mxu0 0
    %173 = vmatmul.mubr.bf16.gmra.mxu0 %v129
    %v174 = vpop.f32.mrf.mxu0
    %v175 = vadd.f32 %v90, %v174
    %v176 = vpop.f32.mrf.mxu0
    %v177 = vadd.f32 %v94, %v176
    %v178 = vpop.f32.mrf.mxu0
    %v179 = vadd.f32 %v90, %v178
    %v180 = vpop.f32.mrf.mxu0
    %v181 = vadd.f32 %v94, %v180
    %182 = vmatprep.mubr.bf16.mxu0 0
    %183 = vmatmul.mubr.bf16.gmra.mxu0 %v132
    %v184 = vpop.f32.mrf.mxu0
    %v185 = vadd.f32 %v90, %v184
    %v186 = vpop.f32.mrf.mxu0
    %v187 = vadd.f32 %v94, %v186
    %v188 = vpop.f32.mrf.mxu0
    %v189 = vadd.f32 %v90, %v188
    %v190 = vpop.f32.mrf.mxu0
    %v191 = vadd.f32 %v94, %v190
    %192 = vmatprep.mubr.bf16.mxu0 0
    %193 = vmatmul.mubr.bf16.gmra.mxu0 %v135
    %v194 = vpop.f32.mrf.mxu0
    %v195 = vadd.f32 %v90, %v194
    %v196 = vpop.f32.mrf.mxu0
    %v197 = vadd.f32 %v94, %v196
    %v198 = vpop.f32.mrf.mxu0
    %v199 = vadd.f32 %v90, %v198
    %v200 = vpop.f32.mrf.mxu0
    %v201 = vadd.f32 %v94, %v200
    %202 = vmatprep.mubr.bf16.mxu0 0
    %203 = vmatmul.mubr.bf16.gmra.mxu0 %v138
    %v204 = vpop.f32.mrf.mxu0
    %v205 = vadd.f32 %v90, %v204
    %v206 = vpop.f32.mrf.mxu0
    %v207 = vadd.f32 %v94, %v206
    %v208 = vpop.f32.mrf.mxu0
    %v209 = vadd.f32 %v90, %v208
    %v210 = vpop.f32.mrf.mxu0
    %v211 = vadd.f32 %v94, %v210
    %212 = vdwg.mxu0
    %213 = vmatprep.subr.bf16.mxu0 0
    %214 = vmatpush1.bf16.msra.mxu0 0
    %215 = vmatprep.subr.bf16.mxu0 0
    %216 = vmatpush1.bf16.msra.mxu0 0
    %217 = vmatprep.subr.bf16.mxu0 0
    %218 = vmatpush1.bf16.msra.mxu0 0
    %219 = vmatprep.subr.bf16.mxu0 0
    %220 = vmatpush1.bf16.msra.mxu0 0
    %221 = vmatprep.subr.bf16.mxu0 0
    %222 = vmatpush1.bf16.msra.mxu0 0
    %223 = vmatprep.subr.bf16.mxu0 0
    %224 = vmatpush1.bf16.msra.mxu0 0
    %225 = vmatprep.subr.bf16.mxu0 0
    %226 = vmatpush1.bf16.msra.mxu0 0
    %227 = vmatprep.subr.bf16.mxu0 %v122
    %228 = vmatpush1.bf16.msra.mxu0 %v121
    %229 = vmatprep.subr.bf16.mxu0 0
    %230 = vmatpush2.bf16.msra.mxu0 0
    %231 = vmatprep.subr.bf16.mxu0 0
    %232 = vmatpush2.bf16.msra.mxu0 0
    %233 = vmatprep.subr.bf16.mxu0 0
    %234 = vmatpush2.bf16.msra.mxu0 0
    %235 = vmatprep.subr.bf16.mxu0 0
    %236 = vmatpush2.bf16.msra.mxu0 0
    %237 = vmatprep.subr.bf16.mxu0 0
    %238 = vmatpush2.bf16.msra.mxu0 0
    %239 = vmatprep.subr.bf16.mxu0 0
    %240 = vmatpush2.bf16.msra.mxu0 0
    %241 = vmatprep.subr.bf16.mxu0 0
    %242 = vmatpush2.bf16.msra.mxu0 0
    %243 = vmatprep.subr.bf16.mxu0 0
    %244 = vmatpush2.bf16.msra.mxu0 0
    %245 = vmatprep.mubr.bf16.mxu0 0
    %246 = vmatmul.mubr.bf16.gmra.mxu0 %v129
    %v247 = vpop.f32.mrf.mxu0
    %v248 = vadd.f32 %v98, %v247
    %v249 = vpop.f32.mrf.mxu0
    %v250 = vadd.f32 %v102, %v249
    %v251 = vpop.f32.mrf.mxu0
    %v252 = vadd.f32 %v98, %v251
    %v253 = vpop.f32.mrf.mxu0
    %v254 = vadd.f32 %v102, %v253
    %255 = vmatprep.mubr.bf16.mxu0 0
    %256 = vmatmul.mubr.bf16.gmra.mxu0 %v132
    %v257 = vpop.f32.mrf.mxu0
    %v258 = vadd.f32 %v98, %v257
    %v259 = vpop.f32.mrf.mxu0
    %v260 = vadd.f32 %v102, %v259
    %v261 = vpop.f32.mrf.mxu0
    %v262 = vadd.f32 %v98, %v261
    %v263 = vpop.f32.mrf.mxu0
    %v264 = vadd.f32 %v102, %v263
    %265 = vmatprep.mubr.bf16.mxu0 0
    %266 = vmatmul.mubr.bf16.gmra.mxu0 %v135
    %v267 = vpop.f32.mrf.mxu0
    %v268 = vadd.f32 %v98, %v267
    %v269 = vpop.f32.mrf.mxu0
    %v270 = vadd.f32 %v102, %v269
    %v271 = vpop.f32.mrf.mxu0
    %v272 = vadd.f32 %v98, %v271
    %v273 = vpop.f32.mrf.mxu0
    %v274 = vadd.f32 %v102, %v273
    %275 = vmatprep.mubr.bf16.mxu0 0
    %276 = vmatmul.mubr.bf16.gmra.mxu0 %v138
    %v277 = vpop.f32.mrf.mxu0
    %v278 = vadd.f32 %v98, %v277
    %v279 = vpop.f32.mrf.mxu0
    %v280 = vadd.f32 %v102, %v279
    %v281 = vpop.f32.mrf.mxu0
    %v282 = vadd.f32 %v98, %v281
    %v283 = vpop.f32.mrf.mxu0
    %v284 = vadd.f32 %v102, %v283
    %285 = vdwg.mxu0
    %v286 = vpack.c.bf16 %v175, %v175
    %v287 = vpack.c.bf16 %v177, %v177
    %v288 = vpack.c.bf16 %v248, %v248
    %v289 = vpack.c.bf16 %v250, %v250
    %v290 = vpack.c.bf16 %v179, %v179
    %v291 = vpack.c.bf16 %v181, %v181
    %v292 = vpack.c.bf16 %v252, %v252
    %v293 = vpack.c.bf16 %v254, %v254
    %v294 = vpack.c.bf16 %v185, %v185
    %v295 = vpack.c.bf16 %v187, %v187
    %v296 = vpack.c.bf16 %v258, %v258
    %v297 = vpack.c.bf16 %v260, %v260
    %v298 = vpack.c.bf16 %v189, %v189
    %v299 = vpack.c.bf16 %v191, %v191
    %v300 = vpack.c.bf16 %v262, %v262
    %v301 = vpack.c.bf16 %v264, %v264
    %v302 = vpack.c.bf16 %v195, %v195
    %v303 = vpack.c.bf16 %v197, %v197
    %v304 = vpack.c.bf16 %v268, %v268
    %v305 = vpack.c.bf16 %v270, %v270
    %v306 = vpack.c.bf16 %v199, %v199
    %v307 = vpack.c.bf16 %v201, %v201
    %v308 = vpack.c.bf16 %v272, %v272
    %v309 = vpack.c.bf16 %v274, %v274
    %v310 = vpack.c.bf16 %v205, %v205
    %v311 = vpack.c.bf16 %v207, %v207
    %v312 = vpack.c.bf16 %v278, %v278
    %v313 = vpack.c.bf16 %v280, %v280
    %v314 = vpack.c.bf16 %v209, %v209
    %v315 = vpack.c.bf16 %v211, %v211
    %v316 = vpack.c.bf16 %v282, %v282
    %v317 = vpack.c.bf16 %v284, %v284
    %v350 = vunpack.c.l.b16 %v286
    %v351 = vunpack.c.l.b16 %v287
    %v352 = vunpack.c.l.b16 %v288
    %v353 = vunpack.c.l.b16 %v289
    %v354 = vunpack.c.l.b16 %v290
    %v355 = vunpack.c.l.b16 %v291
    %v356 = vunpack.c.l.b16 %v292
    %v357 = vunpack.c.l.b16 %v293
    %v358 = vunpack.c.l.b16 %v294
    %v359 = vunpack.c.l.b16 %v295
    %v360 = vunpack.c.l.b16 %v296
    %v361 = vunpack.c.l.b16 %v297
    %v362 = vunpack.c.l.b16 %v298
    %v363 = vunpack.c.l.b16 %v299
    %v364 = vunpack.c.l.b16 %v300
    %v365 = vunpack.c.l.b16 %v301
    %v366 = vunpack.c.l.b16 %v302
    %v367 = vunpack.c.l.b16 %v303
    %v368 = vunpack.c.l.b16 %v304
    %v369 = vunpack.c.l.b16 %v305
    %v370 = vunpack.c.l.b16 %v306
    %v371 = vunpack.c.l.b16 %v307
    %v372 = vunpack.c.l.b16 %v308
    %v373 = vunpack.c.l.b16 %v309
    %v374 = vunpack.c.l.b16 %v310
    %v375 = vunpack.c.l.b16 %v311
    %v376 = vunpack.c.l.b16 %v312
    %v377 = vunpack.c.l.b16 %v313
    %v378 = vunpack.c.l.b16 %v314
    %v379 = vunpack.c.l.b16 %v315
    %v380 = vunpack.c.l.b16 %v316
    %v381 = vunpack.c.l.b16 %v317
    %v382 = vpack.c.b16 %v351, %v350
    %v383 = vpack.c.b16 %v353, %v352
    %v384 = vpack.c.b16 %v355, %v354
    %v385 = vpack.c.b16 %v357, %v356
    %v386 = vpack.c.b16 %v359, %v358
    %v387 = vpack.c.b16 %v361, %v360
    %v388 = vpack.c.b16 %v363, %v362
    %v389 = vpack.c.b16 %v365, %v364
    %v390 = vpack.c.b16 %v367, %v366
    %v391 = vpack.c.b16 %v369, %v368
    %v392 = vpack.c.b16 %v371, %v370
    %v393 = vpack.c.b16 %v373, %v372
    %v394 = vpack.c.b16 %v375, %v374
    %v395 = vpack.c.b16 %v377, %v376
    %v396 = vpack.c.b16 %v379, %v378
    %v397 = vpack.c.b16 %v381, %v380
    %414 = vst [vmem:[#allocation2] sm:$0xff] %v382
    %415 = vst [vmem:[#allocation2 + $0x8] sm:$0xff] %v383
    %416 = vst [vmem:[#allocation2 + $0x10] sm:$0xff] %v384
    %417 = vst [vmem:[#allocation2 + $0x18] sm:$0xff] %v385
    %418 = vst [vmem:[#allocation2 + $0x20] sm:$0xff] %v386
    %419 = vst [vmem:[#allocation2 + $0x28] sm:$0xff] %v387
    %420 = vst [vmem:[#allocation2 + $0x30] sm:$0xff] %v388
    %421 = vst [vmem:[#allocation2 + $0x38] sm:$0xff] %v389
    %422 = vst [vmem:[#allocation2 + $0x40] sm:$0xff] %v390
    %423 = vst [vmem:[#allocation2 + $0x48] sm:$0xff] %v391
    %424 = vst [vmem:[#allocation2 + $0x50] sm:$0xff] %v392
    %425 = vst [vmem:[#allocation2 + $0x58] sm:$0xff] %v393
    %426 = vst [vmem:[#allocation2 + $0x60] sm:$0xff] %v394
    %427 = vst [vmem:[#allocation2 + $0x68] sm:$0xff] %v395
    %428 = vst [vmem:[#allocation2 + $0x70] sm:$0xff] %v396
    %429 = vst [vmem:[#allocation2 + $0x78] sm:$0xff] %v397
    %v430 = vld [vmem:[#allocation10] sm:$0xff]
    %v431 = vld [vmem:[#allocation10 + $0x8] sm:$0xff]
    %v432 = vld [vmem:[#allocation10 + $0x10] sm:$0xff]
    %v433 = vld [vmem:[#allocation10 + $0x18] sm:$0xff]
    %v434 = vld [vmem:[#allocation10 + $0x20] sm:$0xff]
    %v435 = vld [vmem:[#allocation10 + $0x28] sm:$0xff]
    %v436 = vld [vmem:[#allocation10 + $0x30] sm:$0xff]
    %v437 = vld [vmem:[#allocation10 + $0x38] sm:$0xff]
    %v438 = vld [vmem:[#allocation10 + $0x40] sm:$0xff]
    %v439 = vld [vmem:[#allocation10 + $0x48] sm:$0xff]
    %v440 = vld [vmem:[#allocation10 + $0x50] sm:$0xff]
    %v441 = vld [vmem:[#allocation10 + $0x58] sm:$0xff]
    %v442 = vld [vmem:[#allocation10 + $0x60] sm:$0xff]
    %v443 = vld [vmem:[#allocation10 + $0x68] sm:$0xff]
    %v444 = vld [vmem:[#allocation10 + $0x70] sm:$0xff]
    %v445 = vld [vmem:[#allocation10 + $0x78] sm:$0xff]
    %v446 = vld [vmem:[#allocation10 + $0x80] sm:$0xff]
    %v447 = vld [vmem:[#allocation10 + $0x88] sm:$0xff]
    %v448 = vld [vmem:[#allocation10 + $0x90] sm:$0xff]
    %v449 = vld [vmem:[#allocation10 + $0x98] sm:$0xff]
    %v450 = vld [vmem:[#allocation10 + $0xa0] sm:$0xff]
    %v451 = vld [vmem:[#allocation10 + $0xa8] sm:$0xff]
    %v452 = vld [vmem:[#allocation10 + $0xb0] sm:$0xff]
    %v453 = vld [vmem:[#allocation10 + $0xb8] sm:$0xff]
    %v454 = vld [vmem:[#allocation10 + $0xc0] sm:$0xff]
    %v455 = vld [vmem:[#allocation10 + $0xc8] sm:$0xff]
    %v456 = vld [vmem:[#allocation10 + $0xd0] sm:$0xff]
    %v457 = vld [vmem:[#allocation10 + $0xd8] sm:$0xff]
    %v458 = vld [vmem:[#allocation10 + $0xe0] sm:$0xff]
    %v459 = vld [vmem:[#allocation10 + $0xe8] sm:$0xff]
    %v460 = vld [vmem:[#allocation10 + $0xf0] sm:$0xff]
    %v461 = vld [vmem:[#allocation10 + $0xf8] sm:$0xff]
    %v462 = vld [vmem:[#allocation3] sm:$0xff]
    %v463 = vld [vmem:[#allocation4] sm:$0xff]
    %v464 = vld [vmem:[#allocation2] sm:$0xff]
    %v465 = vld [vmem:[#allocation2 + $0x8] sm:$0xff]
    %v466 = vunpack.c.l.bf16 %v464
    %v467 = vunpack.c.h.bf16 %v464
    %v468 = vunpack.c.l.bf16 %v465
    %v469 = vunpack.c.h.bf16 %v465
    %v470 = vpack.c.bf16 %v462, %v462
    %v503 = vunpack.c.l.b16 %v430
    %v504 = vunpack.c.h.b16 %v430
    %v505 = vunpack.c.l.b16 %v431
    %v506 = vunpack.c.h.b16 %v431
    %v507 = vunpack.c.l.b16 %v432
    %v508 = vunpack.c.h.b16 %v432
    %v509 = vunpack.c.l.b16 %v433
    %v510 = vunpack.c.h.b16 %v433
    %v511 = vunpack.c.l.b16 %v434
    %v512 = vunpack.c.h.b16 %v434
    %v513 = vunpack.c.l.b16 %v435
    %v514 = vunpack.c.h.b16 %v435
    %v515 = vunpack.c.l.b16 %v436
    %v516 = vunpack.c.h.b16 %v436
    %v517 = vunpack.c.l.b16 %v437
    %v518 = vunpack.c.h.b16 %v437
    %v519 = vunpack.c.l.b16 %v438
    %v520 = vunpack.c.h.b16 %v438
    %v521 = vunpack.c.l.b16 %v439
    %v522 = vunpack.c.h.b16 %v439
    %v523 = vunpack.c.l.b16 %v440
    %v524 = vunpack.c.h.b16 %v440
    %v525 = vunpack.c.l.b16 %v441
    %v526 = vunpack.c.h.b16 %v441
    %v527 = vunpack.c.l.b16 %v442
    %v528 = vunpack.c.h.b16 %v442
    %v529 = vunpack.c.l.b16 %v443
    %v530 = vunpack.c.h.b16 %v443
    %v531 = vunpack.c.l.b16 %v444
    %v532 = vunpack.c.h.b16 %v444
    %v533 = vunpack.c.l.b16 %v445
    %v534 = vunpack.c.h.b16 %v445
    %v535 = vunpack.c.l.b16 %v446
    %v536 = vunpack.c.h.b16 %v446
    %v537 = vunpack.c.l.b16 %v447
    %v538 = vunpack.c.h.b16 %v447
    %v539 = vunpack.c.l.b16 %v448
    %v540 = vunpack.c.h.b16 %v448
    %v541 = vunpack.c.l.b16 %v449
    %v542 = vunpack.c.h.b16 %v449
    %v543 = vunpack.c.l.b16 %v450
    %v544 = vunpack.c.h.b16 %v450
    %v545 = vunpack.c.l.b16 %v451
    %v546 = vunpack.c.h.b16 %v451
    %v547 = vunpack.c.l.b16 %v452
    %v548 = vunpack.c.h.b16 %v452
    %v549 = vunpack.c.l.b16 %v453
    %v550 = vunpack.c.h.b16 %v453
    %v551 = vunpack.c.l.b16 %v454
    %v552 = vunpack.c.h.b16 %v454
    %v553 = vunpack.c.l.b16 %v455
    %v554 = vunpack.c.h.b16 %v455
    %v555 = vunpack.c.l.b16 %v456
    %v556 = vunpack.c.h.b16 %v456
    %v557 = vunpack.c.l.b16 %v457
    %v558 = vunpack.c.h.b16 %v457
    %v559 = vunpack.c.l.b16 %v458
    %v560 = vunpack.c.h.b16 %v458
    %v561 = vunpack.c.l.b16 %v459
    %v562 = vunpack.c.h.b16 %v459
    %v563 = vunpack.c.l.b16 %v460
    %v564 = vunpack.c.h.b16 %v460
    %v565 = vunpack.c.l.b16 %v461
    %v566 = vunpack.c.h.b16 %v461
    %v567 = vpack.c.b16 %v507, %v503
    %v568 = vpack.c.b16 %v508, %v504
    %v569 = vpack.c.b16 %v509, %v505
    %v570 = vpack.c.b16 %v510, %v506
    %v571 = vpack.c.b16 %v515, %v511
    %v572 = vpack.c.b16 %v516, %v512
    %v573 = vpack.c.b16 %v517, %v513
    %v574 = vpack.c.b16 %v518, %v514
    %v575 = vpack.c.b16 %v523, %v519
    %v576 = vpack.c.b16 %v524, %v520
    %v577 = vpack.c.b16 %v525, %v521
    %v578 = vpack.c.b16 %v526, %v522
    %v579 = vpack.c.b16 %v531, %v527
    %v580 = vpack.c.b16 %v532, %v528
    %v581 = vpack.c.b16 %v533, %v529
    %v582 = vpack.c.b16 %v534, %v530
    %v583 = vpack.c.b16 %v539, %v535
    %v584 = vpack.c.b16 %v540, %v536
    %v585 = vpack.c.b16 %v541, %v537
    %v586 = vpack.c.b16 %v542, %v538
    %v587 = vpack.c.b16 %v547, %v543
    %v588 = vpack.c.b16 %v548, %v544
    %v589 = vpack.c.b16 %v549, %v545
    %v590 = vpack.c.b16 %v550, %v546
    %v591 = vpack.c.b16 %v555, %v551
    %v592 = vpack.c.b16 %v556, %v552
    %v593 = vpack.c.b16 %v557, %v553
    %v594 = vpack.c.b16 %v558, %v554
    %v595 = vpack.c.b16 %v563, %v559
    %v596 = vpack.c.b16 %v564, %v560
    %v597 = vpack.c.b16 %v565, %v561
    %v598 = vpack.c.b16 %v566, %v562
    %631 = vmatprep.subr.bf16.mxu0 %v596
    %632 = vmatpush1.bf16.msra.mxu0 %v595
    %633 = vmatprep.subr.bf16.mxu0 %v592
    %634 = vmatpush1.bf16.msra.mxu0 %v591
    %635 = vmatprep.subr.bf16.mxu0 %v588
    %636 = vmatpush1.bf16.msra.mxu0 %v587
    %637 = vmatprep.subr.bf16.mxu0 %v584
    %638 = vmatpush1.bf16.msra.mxu0 %v583
    %639 = vmatprep.subr.bf16.mxu0 %v580
    %640 = vmatpush1.bf16.msra.mxu0 %v579
    %641 = vmatprep.subr.bf16.mxu0 %v576
    %642 = vmatpush1.bf16.msra.mxu0 %v575
    %643 = vmatprep.subr.bf16.mxu0 %v572
    %644 = vmatpush1.bf16.msra.mxu0 %v571
    %645 = vmatprep.subr.bf16.mxu0 %v568
    %646 = vmatpush1.bf16.msra.mxu0 %v567
    %647 = vmatprep.subr.bf16.mxu0 0
    %648 = vmatpush2.bf16.msra.mxu0 0
    %649 = vmatprep.subr.bf16.mxu0 0
    %650 = vmatpush2.bf16.msra.mxu0 0
    %651 = vmatprep.subr.bf16.mxu0 0
    %652 = vmatpush2.bf16.msra.mxu0 0
    %653 = vmatprep.subr.bf16.mxu0 0
    %654 = vmatpush2.bf16.msra.mxu0 0
    %655 = vmatprep.subr.bf16.mxu0 0
    %656 = vmatpush2.bf16.msra.mxu0 0
    %657 = vmatprep.subr.bf16.mxu0 0
    %658 = vmatpush2.bf16.msra.mxu0 0
    %659 = vmatprep.subr.bf16.mxu0 0
    %660 = vmatpush2.bf16.msra.mxu0 0
    %661 = vmatprep.subr.bf16.mxu0 0
    %662 = vmatpush2.bf16.msra.mxu0 0
    %663 = vmatprep.mubr.bf16.mxu0 0
    %664 = vmatmul.mubr.bf16.gmra.mxu0 %v470
    %v665 = vpop.f32.mrf.mxu0
    %v666 = vadd.f32 0.0, %v665
    %v667 = vpop.f32.mrf.mxu0
    %v668 = vadd.f32 0.0, %v667
    %v669 = vpop.f32.mrf.mxu0
    %v670 = vpop.f32.mrf.mxu0
    %671 = vdwg.mxu0
    %672 = vmatprep.subr.bf16.mxu0 %v598
    %673 = vmatpush1.bf16.msra.mxu0 %v597
    %674 = vmatprep.subr.bf16.mxu0 %v594
    %675 = vmatpush1.bf16.msra.mxu0 %v593
    %676 = vmatprep.subr.bf16.mxu0 %v590
    %677 = vmatpush1.bf16.msra.mxu0 %v589
    %678 = vmatprep.subr.bf16.mxu0 %v586
    %679 = vmatpush1.bf16.msra.mxu0 %v585
    %680 = vmatprep.subr.bf16.mxu0 %v582
    %681 = vmatpush1.bf16.msra.mxu0 %v581
    %682 = vmatprep.subr.bf16.mxu0 %v578
    %683 = vmatpush1.bf16.msra.mxu0 %v577
    %684 = vmatprep.subr.bf16.mxu0 %v574
    %685 = vmatpush1.bf16.msra.mxu0 %v573
    %686 = vmatprep.subr.bf16.mxu0 %v570
    %687 = vmatpush1.bf16.msra.mxu0 %v569
    %688 = vmatprep.subr.bf16.mxu0 0
    %689 = vmatpush2.bf16.msra.mxu0 0
    %690 = vmatprep.subr.bf16.mxu0 0
    %691 = vmatpush2.bf16.msra.mxu0 0
    %692 = vmatprep.subr.bf16.mxu0 0
    %693 = vmatpush2.bf16.msra.mxu0 0
    %694 = vmatprep.subr.bf16.mxu0 0
    %695 = vmatpush2.bf16.msra.mxu0 0
    %696 = vmatprep.subr.bf16.mxu0 0
    %697 = vmatpush2.bf16.msra.mxu0 0
    %698 = vmatprep.subr.bf16.mxu0 0
    %699 = vmatpush2.bf16.msra.mxu0 0
    %700 = vmatprep.subr.bf16.mxu0 0
    %701 = vmatpush2.bf16.msra.mxu0 0
    %702 = vmatprep.subr.bf16.mxu0 0
    %703 = vmatpush2.bf16.msra.mxu0 0
    %704 = vmatprep.mubr.bf16.mxu0 0
    %705 = vmatmul.mubr.bf16.gmra.mxu0 %v470
    %v706 = vpop.f32.mrf.mxu0
    %v707 = vadd.f32 0.0, %v706
    %v708 = vpop.f32.mrf.mxu0
    %v709 = vadd.f32 0.0, %v708
    %v710 = vpop.f32.mrf.mxu0
    %v711 = vpop.f32.mrf.mxu0
    %712 = vdwg.mxu0
    %v713 = vadd.f32 %v466, %v666
    %v714 = vadd.f32 %v467, %v668
    %v715 = vadd.f32 %v468, %v707
    %v716 = vadd.f32 %v469, %v709
    %v717 = vtanh.pop %v713
    %v718 = vtanh.pop %v714
    %v719 = vtanh.pop %v715
    %v720 = vtanh.pop %v716
    %v721 = vmul.f32 %v717, 0.5
    %v722 = vadd.f32 %v721, 0.5
    %v723 = vmul.f32 %v718, 0.5
    %v724 = vadd.f32 %v723, 0.5
    %v725 = vmul.f32 %v720, 0.5
    %v726 = vadd.f32 %v725, 0.5
    %v727 = vmul.f32 %v724, %v463
    %v728 = vmul.f32 %v722, %v719
    %v729 = vadd.f32 %v727, %v728
    %v730 = vtanh.pop %v729
    %v731 = vmul.f32 %v726, %v730
    %732 = vst [vmem:[#allocation3] sm:$0xff] %v731
    %733 = vst [vmem:[#allocation4] sm:$0xff] %v729
    %734 = vst [vmem:[#allocation11] sm:$0xff] %v731
    %v735 = vld [vmem:[#allocation3] sm:$0xff]
    %v736 = vld [vmem:[#allocation4] sm:$0xff]
    %s737 = scalar_lea.vmem [#allocation2], 16
    %v738 = vld [vmem:[%s737] sm:$0xff]
    %v739 = vld [vmem:[%s737 + $0x8] sm:$0xff]
    %v740 = vunpack.c.l.bf16 %v738
    %v741 = vunpack.c.h.bf16 %v738
    %v742 = vunpack.c.l.bf16 %v739
    %v743 = vunpack.c.h.bf16 %v739
    %v744 = vpack.c.bf16 %v735, %v735
    %745 = vmatprep.subr.bf16.mxu0 %v596
    %746 = vmatpush1.bf16.msra.mxu0 %v595
    %747 = vmatprep.subr.bf16.mxu0 %v592
    %748 = vmatpush1.bf16.msra.mxu0 %v591
    %749 = vmatprep.subr.bf16.mxu0 %v588
    %750 = vmatpush1.bf16.msra.mxu0 %v587
    %751 = vmatprep.subr.bf16.mxu0 %v584
    %752 = vmatpush1.bf16.msra.mxu0 %v583
    %753 = vmatprep.subr.bf16.mxu0 %v580
    %754 = vmatpush1.bf16.msra.mxu0 %v579
    %755 = vmatprep.subr.bf16.mxu0 %v576
    %756 = vmatpush1.bf16.msra.mxu0 %v575
    %757 = vmatprep.subr.bf16.mxu0 %v572
    %758 = vmatpush1.bf16.msra.mxu0 %v571
    %759 = vmatprep.subr.bf16.mxu0 %v568
    %760 = vmatpush1.bf16.msra.mxu0 %v567
    %761 = vmatprep.subr.bf16.mxu0 0
    %762 = vmatpush2.bf16.msra.mxu0 0
    %763 = vmatprep.subr.bf16.mxu0 0
    %764 = vmatpush2.bf16.msra.mxu0 0
    %765 = vmatprep.subr.bf16.mxu0 0
    %766 = vmatpush2.bf16.msra.mxu0 0
    %767 = vmatprep.subr.bf16.mxu0 0
    %768 = vmatpush2.bf16.msra.mxu0 0
    %769 = vmatprep.subr.bf16.mxu0 0
    %770 = vmatpush2.bf16.msra.mxu0 0
    %771 = vmatprep.subr.bf16.mxu0 0
    %772 = vmatpush2.bf16.msra.mxu0 0
    %773 = vmatprep.subr.bf16.mxu0 0
    %774 = vmatpush2.bf16.msra.mxu0 0
    %775 = vmatprep.subr.bf16.mxu0 0
    %776 = vmatpush2.bf16.msra.mxu0 0
    %777 = vmatprep.mubr.bf16.mxu0 0
    %778 = vmatmul.mubr.bf16.gmra.mxu0 %v744
    %v779 = vpop.f32.mrf.mxu0
    %v780 = vadd.f32 0.0, %v779
    %v781 = vpop.f32.mrf.mxu0
    %v782 = vadd.f32 0.0, %v781
    %v783 = vpop.f32.mrf.mxu0
    %v784 = vpop.f32.mrf.mxu0
    %785 = vdwg.mxu0
    %786 = vmatprep.subr.bf16.mxu0 %v598
    %787 = vmatpush1.bf16.msra.mxu0 %v597
    %788 = vmatprep.subr.bf16.mxu0 %v594
    %789 = vmatpush1.bf16.msra.mxu0 %v593
    %790 = vmatprep.subr.bf16.mxu0 %v590
    %791 = vmatpush1.bf16.msra.mxu0 %v589
    %792 = vmatprep.subr.bf16.mxu0 %v586
    %793 = vmatpush1.bf16.msra.mxu0 %v585
    %794 = vmatprep.subr.bf16.mxu0 %v582
    %795 = vmatpush1.bf16.msra.mxu0 %v581
    %796 = vmatprep.subr.bf16.mxu0 %v578
    %797 = vmatpush1.bf16.msra.mxu0 %v577
    %798 = vmatprep.subr.bf16.mxu0 %v574
    %799 = vmatpush1.bf16.msra.mxu0 %v573
    %800 = vmatprep.subr.bf16.mxu0 %v570
    %801 = vmatpush1.bf16.msra.mxu0 %v569
    %802 = vmatprep.subr.bf16.mxu0 0
    %803 = vmatpush2.bf16.msra.mxu0 0
    %804 = vmatprep.subr.bf16.mxu0 0
    %805 = vmatpush2.bf16.msra.mxu0 0
    %806 = vmatprep.subr.bf16.mxu0 0
    %807 = vmatpush2.bf16.msra.mxu0 0
    %808 = vmatprep.subr.bf16.mxu0 0
    %809 = vmatpush2.bf16.msra.mxu0 0
    %810 = vmatprep.subr.bf16.mxu0 0
    %811 = vmatpush2.bf16.msra.mxu0 0
    %812 = vmatprep.subr.bf16.mxu0 0
    %813 = vmatpush2.bf16.msra.mxu0 0
    %814 = vmatprep.subr.bf16.mxu0 0
    %815 = vmatpush2.bf16.msra.mxu0 0
    %816 = vmatprep.subr.bf16.mxu0 0
    %817 = vmatpush2.bf16.msra.mxu0 0
    %818 = vmatprep.mubr.bf16.mxu0 0
    %819 = vmatmul.mubr.bf16.gmra.mxu0 %v744
    %v820 = vpop.f32.mrf.mxu0
    %v821 = vadd.f32 0.0, %v820
    %v822 = vpop.f32.mrf.mxu0
    %v823 = vadd.f32 0.0, %v822
    %v824 = vpop.f32.mrf.mxu0
    %v825 = vpop.f32.mrf.mxu0
    %826 = vdwg.mxu0
    %v827 = vadd.f32 %v740, %v780
    %v828 = vadd.f32 %v741, %v782
    %v829 = vadd.f32 %v742, %v821
    %v830 = vadd.f32 %v743, %v823
    %v831 = vtanh.pop %v827
    %v832 = vtanh.pop %v828
    %v833 = vtanh.pop %v829
    %v834 = vtanh.pop %v830
    %v835 = vmul.f32 %v831, 0.5
    %v836 = vadd.f32 %v835, 0.5
    %v837 = vmul.f32 %v832, 0.5
    %v838 = vadd.f32 %v837, 0.5
    %v839 = vmul.f32 %v834, 0.5
    %v840 = vadd.f32 %v839, 0.5
    %v841 = vmul.f32 %v838, %v736
    %v842 = vmul.f32 %v836, %v833
    %v843 = vadd.f32 %v841, %v842
    %v844 = vtanh.pop %v843
    %v845 = vmul.f32 %v840, %v844
    %846 = vst [vmem:[#allocation3] sm:$0xff] %v845
    %847 = vst [vmem:[#allocation4] sm:$0xff] %v843
    %s848 = scalar_lea.vmem [#allocation11], 8
    %849 = vst [vmem:[%s848] sm:$0xff] %v845
    %v850 = vld [vmem:[#allocation3] sm:$0xff]
    %v851 = vld [vmem:[#allocation4] sm:$0xff]
    %s852 = scalar_lea.vmem [#allocation2], 32
    %v853 = vld [vmem:[%s852] sm:$0xff]
    %v854 = vld [vmem:[%s852 + $0x8] sm:$0xff]
    %v855 = vunpack.c.l.bf16 %v853
    %v856 = vunpack.c.h.bf16 %v853
    %v857 = vunpack.c.l.bf16 %v854
    %v858 = vunpack.c.h.bf16 %v854
    %v859 = vpack.c.bf16 %v850, %v850
    %860 = vmatprep.subr.bf16.mxu0 %v596
    %861 = vmatpush1.bf16.msra.mxu0 %v595
    %862 = vmatprep.subr.bf16.mxu0 %v592
    %863 = vmatpush1.bf16.msra.mxu0 %v591
    %864 = vmatprep.subr.bf16.mxu0 %v588
    %865 = vmatpush1.bf16.msra.mxu0 %v587
    %866 = vmatprep.subr.bf16.mxu0 %v584
    %867 = vmatpush1.bf16.msra.mxu0 %v583
    %868 = vmatprep.subr.bf16.mxu0 %v580
    %869 = vmatpush1.bf16.msra.mxu0 %v579
    %870 = vmatprep.subr.bf16.mxu0 %v576
    %871 = vmatpush1.bf16.msra.mxu0 %v575
    %872 = vmatprep.subr.bf16.mxu0 %v572
    %873 = vmatpush1.bf16.msra.mxu0 %v571
    %874 = vmatprep.subr.bf16.mxu0 %v568
    %875 = vmatpush1.bf16.msra.mxu0 %v567
    %876 = vmatprep.subr.bf16.mxu0 0
    %877 = vmatpush2.bf16.msra.mxu0 0
    %878 = vmatprep.subr.bf16.mxu0 0
    %879 = vmatpush2.bf16.msra.mxu0 0
    %880 = vmatprep.subr.bf16.mxu0 0
    %881 = vmatpush2.bf16.msra.mxu0 0
    %882 = vmatprep.subr.bf16.mxu0 0
    %883 = vmatpush2.bf16.msra.mxu0 0
    %884 = vmatprep.subr.bf16.mxu0 0
    %885 = vmatpush2.bf16.msra.mxu0 0
    %886 = vmatprep.subr.bf16.mxu0 0
    %887 = vmatpush2.bf16.msra.mxu0 0
    %888 = vmatprep.subr.bf16.mxu0 0
    %889 = vmatpush2.bf16.msra.mxu0 0
    %890 = vmatprep.subr.bf16.mxu0 0
    %891 = vmatpush2.bf16.msra.mxu0 0
    %892 = vmatprep.mubr.bf16.mxu0 0
    %893 = vmatmul.mubr.bf16.gmra.mxu0 %v859
    %v894 = vpop.f32.mrf.mxu0
    %v895 = vadd.f32 0.0, %v894
    %v896 = vpop.f32.mrf.mxu0
    %v897 = vadd.f32 0.0, %v896
    %v898 = vpop.f32.mrf.mxu0
    %v899 = vpop.f32.mrf.mxu0
    %900 = vdwg.mxu0
    %901 = vmatprep.subr.bf16.mxu0 %v598
    %902 = vmatpush1.bf16.msra.mxu0 %v597
    %903 = vmatprep.subr.bf16.mxu0 %v594
    %904 = vmatpush1.bf16.msra.mxu0 %v593
    %905 = vmatprep.subr.bf16.mxu0 %v590
    %906 = vmatpush1.bf16.msra.mxu0 %v589
    %907 = vmatprep.subr.bf16.mxu0 %v586
    %908 = vmatpush1.bf16.msra.mxu0 %v585
    %909 = vmatprep.subr.bf16.mxu0 %v582
    %910 = vmatpush1.bf16.msra.mxu0 %v581
    %911 = vmatprep.subr.bf16.mxu0 %v578
    %912 = vmatpush1.bf16.msra.mxu0 %v577
    %913 = vmatprep.subr.bf16.mxu0 %v574
    %914 = vmatpush1.bf16.msra.mxu0 %v573
    %915 = vmatprep.subr.bf16.mxu0 %v570
    %916 = vmatpush1.bf16.msra.mxu0 %v569
    %917 = vmatprep.subr.bf16.mxu0 0
    %918 = vmatpush2.bf16.msra.mxu0 0
    %919 = vmatprep.subr.bf16.mxu0 0
    %920 = vmatpush2.bf16.msra.mxu0 0
    %921 = vmatprep.subr.bf16.mxu0 0
    %922 = vmatpush2.bf16.msra.mxu0 0
    %923 = vmatprep.subr.bf16.mxu0 0
    %924 = vmatpush2.bf16.msra.mxu0 0
    %925 = vmatprep.subr.bf16.mxu0 0
    %926 = vmatpush2.bf16.msra.mxu0 0
    %927 = vmatprep.subr.bf16.mxu0 0
    %928 = vmatpush2.bf16.msra.mxu0 0
    %929 = vmatprep.subr.bf16.mxu0 0
    %930 = vmatpush2.bf16.msra.mxu0 0
    %931 = vmatprep.subr.bf16.mxu0 0
    %932 = vmatpush2.bf16.msra.mxu0 0
    %933 = vmatprep.mubr.bf16.mxu0 0
    %934 = vmatmul.mubr.bf16.gmra.mxu0 %v859
    %v935 = vpop.f32.mrf.mxu0
    %v936 = vadd.f32 0.0, %v935
    %v937 = vpop.f32.mrf.mxu0
    %v938 = vadd.f32 0.0, %v937
    %v939 = vpop.f32.mrf.mxu0
    %v940 = vpop.f32.mrf.mxu0
    %941 = vdwg.mxu0
    %v942 = vadd.f32 %v855, %v895
    %v943 = vadd.f32 %v856, %v897
    %v944 = vadd.f32 %v857, %v936
    %v945 = vadd.f32 %v858, %v938
    %v946 = vtanh.pop %v942
    %v947 = vtanh.pop %v943
    %v948 = vtanh.pop %v944
    %v949 = vtanh.pop %v945
    %v950 = vmul.f32 %v946, 0.5
    %v951 = vadd.f32 %v950, 0.5
    %v952 = vmul.f32 %v947, 0.5
    %v953 = vadd.f32 %v952, 0.5
    %v954 = vmul.f32 %v949, 0.5
    %v955 = vadd.f32 %v954, 0.5
    %v956 = vmul.f32 %v953, %v851
    %v957 = vmul.f32 %v951, %v948
    %v958 = vadd.f32 %v956, %v957
    %v959 = vtanh.pop %v958
    %v960 = vmul.f32 %v955, %v959
    %961 = vst [vmem:[#allocation3] sm:$0xff] %v960
    %962 = vst [vmem:[#allocation4] sm:$0xff] %v958
    %s963 = scalar_lea.vmem [#allocation11], 16
    %964 = vst [vmem:[%s963] sm:$0xff] %v960
    %v965 = vld [vmem:[#allocation3] sm:$0xff]
    %v966 = vld [vmem:[#allocation4] sm:$0xff]
    %s967 = scalar_lea.vmem [#allocation2], 48
    %v968 = vld [vmem:[%s967] sm:$0xff]
    %v969 = vld [vmem:[%s967 + $0x8] sm:$0xff]
    %v970 = vunpack.c.l.bf16 %v968
    %v971 = vunpack.c.h.bf16 %v968
    %v972 = vunpack.c.l.bf16 %v969
    %v973 = vunpack.c.h.bf16 %v969
    %v974 = vpack.c.bf16 %v965, %v965
    %975 = vmatprep.subr.bf16.mxu0 %v596
    %976 = vmatpush1.bf16.msra.mxu0 %v595
    %977 = vmatprep.subr.bf16.mxu0 %v592
    %978 = vmatpush1.bf16.msra.mxu0 %v591
    %979 = vmatprep.subr.bf16.mxu0 %v588
    %980 = vmatpush1.bf16.msra.mxu0 %v587
    %981 = vmatprep.subr.bf16.mxu0 %v584
    %982 = vmatpush1.bf16.msra.mxu0 %v583
    %983 = vmatprep.subr.bf16.mxu0 %v580
    %984 = vmatpush1.bf16.msra.mxu0 %v579
    %985 = vmatprep.subr.bf16.mxu0 %v576
    %986 = vmatpush1.bf16.msra.mxu0 %v575
    %987 = vmatprep.subr.bf16.mxu0 %v572
    %988 = vmatpush1.bf16.msra.mxu0 %v571
    %989 = vmatprep.subr.bf16.mxu0 %v568
    %990 = vmatpush1.bf16.msra.mxu0 %v567
    %991 = vmatprep.subr.bf16.mxu0 0
    %992 = vmatpush2.bf16.msra.mxu0 0
    %993 = vmatprep.subr.bf16.mxu0 0
    %994 = vmatpush2.bf16.msra.mxu0 0
    %995 = vmatprep.subr.bf16.mxu0 0
    %996 = vmatpush2.bf16.msra.mxu0 0
    %997 = vmatprep.subr.bf16.mxu0 0
    %998 = vmatpush2.bf16.msra.mxu0 0
    %999 = vmatprep.subr.bf16.mxu0 0
    %1000 = vmatpush2.bf16.msra.mxu0 0
    %1001 = vmatprep.subr.bf16.mxu0 0
    %1002 = vmatpush2.bf16.msra.mxu0 0
    %1003 = vmatprep.subr.bf16.mxu0 0
    %1004 = vmatpush2.bf16.msra.mxu0 0
    %1005 = vmatprep.subr.bf16.mxu0 0
    %1006 = vmatpush2.bf16.msra.mxu0 0
    %1007 = vmatprep.mubr.bf16.mxu0 0
    %1008 = vmatmul.mubr.bf16.gmra.mxu0 %v974
    %v1009 = vpop.f32.mrf.mxu0
    %v1010 = vadd.f32 0.0, %v1009
    %v1011 = vpop.f32.mrf.mxu0
    %v1012 = vadd.f32 0.0, %v1011
    %v1013 = vpop.f32.mrf.mxu0
    %v1014 = vpop.f32.mrf.mxu0
    %1015 = vdwg.mxu0
    %1016 = vmatprep.subr.bf16.mxu0 %v598
    %1017 = vmatpush1.bf16.msra.mxu0 %v597
    %1018 = vmatprep.subr.bf16.mxu0 %v594
    %1019 = vmatpush1.bf16.msra.mxu0 %v593
    %1020 = vmatprep.subr.bf16.mxu0 %v590
    %1021 = vmatpush1.bf16.msra.mxu0 %v589
    %1022 = vmatprep.subr.bf16.mxu0 %v586
    %1023 = vmatpush1.bf16.msra.mxu0 %v585
    %1024 = vmatprep.subr.bf16.mxu0 %v582
    %1025 = vmatpush1.bf16.msra.mxu0 %v581
    %1026 = vmatprep.subr.bf16.mxu0 %v578
    %1027 = vmatpush1.bf16.msra.mxu0 %v577
    %1028 = vmatprep.subr.bf16.mxu0 %v574
    %1029 = vmatpush1.bf16.msra.mxu0 %v573
    %1030 = vmatprep.subr.bf16.mxu0 %v570
    %1031 = vmatpush1.bf16.msra.mxu0 %v569
    %1032 = vmatprep.subr.bf16.mxu0 0
    %1033 = vmatpush2.bf16.msra.mxu0 0
    %1034 = vmatprep.subr.bf16.mxu0 0
    %1035 = vmatpush2.bf16.msra.mxu0 0
    %1036 = vmatprep.subr.bf16.mxu0 0
    %1037 = vmatpush2.bf16.msra.mxu0 0
    %1038 = vmatprep.subr.bf16.mxu0 0
    %1039 = vmatpush2.bf16.msra.mxu0 0
    %1040 = vmatprep.subr.bf16.mxu0 0
    %1041 = vmatpush2.bf16.msra.mxu0 0
    %1042 = vmatprep.subr.bf16.mxu0 0
    %1043 = vmatpush2.bf16.msra.mxu0 0
    %1044 = vmatprep.subr.bf16.mxu0 0
    %1045 = vmatpush2.bf16.msra.mxu0 0
    %1046 = vmatprep.subr.bf16.mxu0 0
    %1047 = vmatpush2.bf16.msra.mxu0 0
    %1048 = vmatprep.mubr.bf16.mxu0 0
    %1049 = vmatmul.mubr.bf16.gmra.mxu0 %v974
    %v1050 = vpop.f32.mrf.mxu0
    %v1051 = vadd.f32 0.0, %v1050
    %v1052 = vpop.f32.mrf.mxu0
    %v1053 = vadd.f32 0.0, %v1052
    %v1054 = vpop.f32.mrf.mxu0
    %v1055 = vpop.f32.mrf.mxu0
    %1056 = vdwg.mxu0
    %v1057 = vadd.f32 %v970, %v1010
    %v1058 = vadd.f32 %v971, %v1012
    %v1059 = vadd.f32 %v972, %v1051
    %v1060 = vadd.f32 %v973, %v1053
    %v1061 = vtanh.pop %v1057
    %v1062 = vtanh.pop %v1058
    %v1063 = vtanh.pop %v1059
    %v1064 = vtanh.pop %v1060
    %v1065 = vmul.f32 %v1061, 0.5
    %v1066 = vadd.f32 %v1065, 0.5
    %v1067 = vmul.f32 %v1062, 0.5
    %v1068 = vadd.f32 %v1067, 0.5
    %v1069 = vmul.f32 %v1064, 0.5
    %v1070 = vadd.f32 %v1069, 0.5
    %v1071 = vmul.f32 %v1068, %v966
    %v1072 = vmul.f32 %v1066, %v1063
    %v1073 = vadd.f32 %v1071, %v1072
    %v1074 = vtanh.pop %v1073
    %v1075 = vmul.f32 %v1070, %v1074
    %1076 = vst [vmem:[#allocation3] sm:$0xff] %v1075
    %1077 = vst [vmem:[#allocation4] sm:$0xff] %v1073
    %s1078 = scalar_lea.vmem [#allocation11], 24
    %1079 = vst [vmem:[%s1078] sm:$0xff] %v1075
    %v1080 = vld [vmem:[#allocation3] sm:$0xff]
    %v1081 = vld [vmem:[#allocation4] sm:$0xff]
    %s1082 = scalar_lea.vmem [#allocation2], 64
    %v1083 = vld [vmem:[%s1082] sm:$0xff]
    %v1084 = vld [vmem:[%s1082 + $0x8] sm:$0xff]
    %v1085 = vunpack.c.l.bf16 %v1083
    %v1086 = vunpack.c.h.bf16 %v1083
    %v1087 = vunpack.c.l.bf16 %v1084
    %v1088 = vunpack.c.h.bf16 %v1084
    %v1089 = vpack.c.bf16 %v1080, %v1080
    %1090 = vmatprep.subr.bf16.mxu0 %v596
    %1091 = vmatpush1.bf16.msra.mxu0 %v595
    %1092 = vmatprep.subr.bf16.mxu0 %v592
    %1093 = vmatpush1.bf16.msra.mxu0 %v591
    %1094 = vmatprep.subr.bf16.mxu0 %v588
    %1095 = vmatpush1.bf16.msra.mxu0 %v587
    %1096 = vmatprep.subr.bf16.mxu0 %v584
    %1097 = vmatpush1.bf16.msra.mxu0 %v583
    %1098 = vmatprep.subr.bf16.mxu0 %v580
    %1099 = vmatpush1.bf16.msra.mxu0 %v579
    %1100 = vmatprep.subr.bf16.mxu0 %v576
    %1101 = vmatpush1.bf16.msra.mxu0 %v575
    %1102 = vmatprep.subr.bf16.mxu0 %v572
    %1103 = vmatpush1.bf16.msra.mxu0 %v571
    %1104 = vmatprep.subr.bf16.mxu0 %v568
    %1105 = vmatpush1.bf16.msra.mxu0 %v567
    %1106 = vmatprep.subr.bf16.mxu0 0
    %1107 = vmatpush2.bf16.msra.mxu0 0
    %1108 = vmatprep.subr.bf16.mxu0 0
    %1109 = vmatpush2.bf16.msra.mxu0 0
    %1110 = vmatprep.subr.bf16.mxu0 0
    %1111 = vmatpush2.bf16.msra.mxu0 0
    %1112 = vmatprep.subr.bf16.mxu0 0
    %1113 = vmatpush2.bf16.msra.mxu0 0
    %1114 = vmatprep.subr.bf16.mxu0 0
    %1115 = vmatpush2.bf16.msra.mxu0 0
    %1116 = vmatprep.subr.bf16.mxu0 0
    %1117 = vmatpush2.bf16.msra.mxu0 0
    %1118 = vmatprep.subr.bf16.mxu0 0
    %1119 = vmatpush2.bf16.msra.mxu0 0
    %1120 = vmatprep.subr.bf16.mxu0 0
    %1121 = vmatpush2.bf16.msra.mxu0 0
    %1122 = vmatprep.mubr.bf16.mxu0 0
    %1123 = vmatmul.mubr.bf16.gmra.mxu0 %v1089
    %v1124 = vpop.f32.mrf.mxu0
    %v1125 = vadd.f32 0.0, %v1124
    %v1126 = vpop.f32.mrf.mxu0
    %v1127 = vadd.f32 0.0, %v1126
    %v1128 = vpop.f32.mrf.mxu0
    %v1129 = vpop.f32.mrf.mxu0
    %1130 = vdwg.mxu0
    %1131 = vmatprep.subr.bf16.mxu0 %v598
    %1132 = vmatpush1.bf16.msra.mxu0 %v597
    %1133 = vmatprep.subr.bf16.mxu0 %v594
    %1134 = vmatpush1.bf16.msra.mxu0 %v593
    %1135 = vmatprep.subr.bf16.mxu0 %v590
    %1136 = vmatpush1.bf16.msra.mxu0 %v589
    %1137 = vmatprep.subr.bf16.mxu0 %v586
    %1138 = vmatpush1.bf16.msra.mxu0 %v585
    %1139 = vmatprep.subr.bf16.mxu0 %v582
    %1140 = vmatpush1.bf16.msra.mxu0 %v581
    %1141 = vmatprep.subr.bf16.mxu0 %v578
    %1142 = vmatpush1.bf16.msra.mxu0 %v577
    %1143 = vmatprep.subr.bf16.mxu0 %v574
    %1144 = vmatpush1.bf16.msra.mxu0 %v573
    %1145 = vmatprep.subr.bf16.mxu0 %v570
    %1146 = vmatpush1.bf16.msra.mxu0 %v569
    %1147 = vmatprep.subr.bf16.mxu0 0
    %1148 = vmatpush2.bf16.msra.mxu0 0
    %1149 = vmatprep.subr.bf16.mxu0 0
    %1150 = vmatpush2.bf16.msra.mxu0 0
    %1151 = vmatprep.subr.bf16.mxu0 0
    %1152 = vmatpush2.bf16.msra.mxu0 0
    %1153 = vmatprep.subr.bf16.mxu0 0
    %1154 = vmatpush2.bf16.msra.mxu0 0
    %1155 = vmatprep.subr.bf16.mxu0 0
    %1156 = vmatpush2.bf16.msra.mxu0 0
    %1157 = vmatprep.subr.bf16.mxu0 0
    %1158 = vmatpush2.bf16.msra.mxu0 0
    %1159 = vmatprep.subr.bf16.mxu0 0
    %1160 = vmatpush2.bf16.msra.mxu0 0
    %1161 = vmatprep.subr.bf16.mxu0 0
    %1162 = vmatpush2.bf16.msra.mxu0 0
    %1163 = vmatprep.mubr.bf16.mxu0 0
    %1164 = vmatmul.mubr.bf16.gmra.mxu0 %v1089
    %v1165 = vpop.f32.mrf.mxu0
    %v1166 = vadd.f32 0.0, %v1165
    %v1167 = vpop.f32.mrf.mxu0
    %v1168 = vadd.f32 0.0, %v1167
    %v1169 = vpop.f32.mrf.mxu0
    %v1170 = vpop.f32.mrf.mxu0
    %1171 = vdwg.mxu0
    %v1172 = vadd.f32 %v1085, %v1125
    %v1173 = vadd.f32 %v1086, %v1127
    %v1174 = vadd.f32 %v1087, %v1166
    %v1175 = vadd.f32 %v1088, %v1168
    %v1176 = vtanh.pop %v1172
    %v1177 = vtanh.pop %v1173
    %v1178 = vtanh.pop %v1174
    %v1179 = vtanh.pop %v1175
    %v1180 = vmul.f32 %v1176, 0.5
    %v1181 = vadd.f32 %v1180, 0.5
    %v1182 = vmul.f32 %v1177, 0.5
    %v1183 = vadd.f32 %v1182, 0.5
    %v1184 = vmul.f32 %v1179, 0.5
    %v1185 = vadd.f32 %v1184, 0.5
    %v1186 = vmul.f32 %v1183, %v1081
    %v1187 = vmul.f32 %v1181, %v1178
    %v1188 = vadd.f32 %v1186, %v1187
    %v1189 = vtanh.pop %v1188
    %v1190 = vmul.f32 %v1185, %v1189
    %1191 = vst [vmem:[#allocation3] sm:$0xff] %v1190
    %1192 = vst [vmem:[#allocation4] sm:$0xff] %v1188
    %s1193 = scalar_lea.vmem [#allocation11], 32
    %1194 = vst [vmem:[%s1193] sm:$0xff] %v1190
    %v1195 = vld [vmem:[#allocation3] sm:$0xff]
    %v1196 = vld [vmem:[#allocation4] sm:$0xff]
    %s1197 = scalar_lea.vmem [#allocation2], 80
    %v1198 = vld [vmem:[%s1197] sm:$0xff]
    %v1199 = vld [vmem:[%s1197 + $0x8] sm:$0xff]
    %v1200 = vunpack.c.l.bf16 %v1198
    %v1201 = vunpack.c.h.bf16 %v1198
    %v1202 = vunpack.c.l.bf16 %v1199
    %v1203 = vunpack.c.h.bf16 %v1199
    %v1204 = vpack.c.bf16 %v1195, %v1195
    %1205 = vmatprep.subr.bf16.mxu0 %v596
    %1206 = vmatpush1.bf16.msra.mxu0 %v595
    %1207 = vmatprep.subr.bf16.mxu0 %v592
    %1208 = vmatpush1.bf16.msra.mxu0 %v591
    %1209 = vmatprep.subr.bf16.mxu0 %v588
    %1210 = vmatpush1.bf16.msra.mxu0 %v587
    %1211 = vmatprep.subr.bf16.mxu0 %v584
    %1212 = vmatpush1.bf16.msra.mxu0 %v583
    %1213 = vmatprep.subr.bf16.mxu0 %v580
    %1214 = vmatpush1.bf16.msra.mxu0 %v579
    %1215 = vmatprep.subr.bf16.mxu0 %v576
    %1216 = vmatpush1.bf16.msra.mxu0 %v575
    %1217 = vmatprep.subr.bf16.mxu0 %v572
    %1218 = vmatpush1.bf16.msra.mxu0 %v571
    %1219 = vmatprep.subr.bf16.mxu0 %v568
    %1220 = vmatpush1.bf16.msra.mxu0 %v567
    %1221 = vmatprep.subr.bf16.mxu0 0
    %1222 = vmatpush2.bf16.msra.mxu0 0
    %1223 = vmatprep.subr.bf16.mxu0 0
    %1224 = vmatpush2.bf16.msra.mxu0 0
    %1225 = vmatprep.subr.bf16.mxu0 0
    %1226 = vmatpush2.bf16.msra.mxu0 0
    %1227 = vmatprep.subr.bf16.mxu0 0
    %1228 = vmatpush2.bf16.msra.mxu0 0
    %1229 = vmatprep.subr.bf16.mxu0 0
    %1230 = vmatpush2.bf16.msra.mxu0 0
    %1231 = vmatprep.subr.bf16.mxu0 0
    %1232 = vmatpush2.bf16.msra.mxu0 0
    %1233 = vmatprep.subr.bf16.mxu0 0
    %1234 = vmatpush2.bf16.msra.mxu0 0
    %1235 = vmatprep.subr.bf16.mxu0 0
    %1236 = vmatpush2.bf16.msra.mxu0 0
    %1237 = vmatprep.mubr.bf16.mxu0 0
    %1238 = vmatmul.mubr.bf16.gmra.mxu0 %v1204
    %v1239 = vpop.f32.mrf.mxu0
    %v1240 = vadd.f32 0.0, %v1239
    %v1241 = vpop.f32.mrf.mxu0
    %v1242 = vadd.f32 0.0, %v1241
    %v1243 = vpop.f32.mrf.mxu0
    %v1244 = vpop.f32.mrf.mxu0
    %1245 = vdwg.mxu0
    %1246 = vmatprep.subr.bf16.mxu0 %v598
    %1247 = vmatpush1.bf16.msra.mxu0 %v597
    %1248 = vmatprep.subr.bf16.mxu0 %v594
    %1249 = vmatpush1.bf16.msra.mxu0 %v593
    %1250 = vmatprep.subr.bf16.mxu0 %v590
    %1251 = vmatpush1.bf16.msra.mxu0 %v589
    %1252 = vmatprep.subr.bf16.mxu0 %v586
    %1253 = vmatpush1.bf16.msra.mxu0 %v585
    %1254 = vmatprep.subr.bf16.mxu0 %v582
    %1255 = vmatpush1.bf16.msra.mxu0 %v581
    %1256 = vmatprep.subr.bf16.mxu0 %v578
    %1257 = vmatpush1.bf16.msra.mxu0 %v577
    %1258 = vmatprep.subr.bf16.mxu0 %v574
    %1259 = vmatpush1.bf16.msra.mxu0 %v573
    %1260 = vmatprep.subr.bf16.mxu0 %v570
    %1261 = vmatpush1.bf16.msra.mxu0 %v569
    %1262 = vmatprep.subr.bf16.mxu0 0
    %1263 = vmatpush2.bf16.msra.mxu0 0
    %1264 = vmatprep.subr.bf16.mxu0 0
    %1265 = vmatpush2.bf16.msra.mxu0 0
    %1266 = vmatprep.subr.bf16.mxu0 0
    %1267 = vmatpush2.bf16.msra.mxu0 0
    %1268 = vmatprep.subr.bf16.mxu0 0
    %1269 = vmatpush2.bf16.msra.mxu0 0
    %1270 = vmatprep.subr.bf16.mxu0 0
    %1271 = vmatpush2.bf16.msra.mxu0 0
    %1272 = vmatprep.subr.bf16.mxu0 0
    %1273 = vmatpush2.bf16.msra.mxu0 0
    %1274 = vmatprep.subr.bf16.mxu0 0
    %1275 = vmatpush2.bf16.msra.mxu0 0
    %1276 = vmatprep.subr.bf16.mxu0 0
    %1277 = vmatpush2.bf16.msra.mxu0 0
    %1278 = vmatprep.mubr.bf16.mxu0 0
    %1279 = vmatmul.mubr.bf16.gmra.mxu0 %v1204
    %v1280 = vpop.f32.mrf.mxu0
    %v1281 = vadd.f32 0.0, %v1280
    %v1282 = vpop.f32.mrf.mxu0
    %v1283 = vadd.f32 0.0, %v1282
    %v1284 = vpop.f32.mrf.mxu0
    %v1285 = vpop.f32.mrf.mxu0
    %1286 = vdwg.mxu0
    %v1287 = vadd.f32 %v1200, %v1240
    %v1288 = vadd.f32 %v1201, %v1242
    %v1289 = vadd.f32 %v1202, %v1281
    %v1290 = vadd.f32 %v1203, %v1283
    %v1291 = vtanh.pop %v1287
    %v1292 = vtanh.pop %v1288
    %v1293 = vtanh.pop %v1289
    %v1294 = vtanh.pop %v1290
    %v1295 = vmul.f32 %v1291, 0.5
    %v1296 = vadd.f32 %v1295, 0.5
    %v1297 = vmul.f32 %v1292, 0.5
    %v1298 = vadd.f32 %v1297, 0.5
    %v1299 = vmul.f32 %v1294, 0.5
    %v1300 = vadd.f32 %v1299, 0.5
    %v1301 = vmul.f32 %v1298, %v1196
    %v1302 = vmul.f32 %v1296, %v1293
    %v1303 = vadd.f32 %v1301, %v1302
    %v1304 = vtanh.pop %v1303
    %v1305 = vmul.f32 %v1300, %v1304
    %1306 = vst [vmem:[#allocation3] sm:$0xff] %v1305
    %1307 = vst [vmem:[#allocation4] sm:$0xff] %v1303
    %s1308 = scalar_lea.vmem [#allocation11], 40
    %1309 = vst [vmem:[%s1308] sm:$0xff] %v1305
    %v1310 = vld [vmem:[#allocation3] sm:$0xff]
    %v1311 = vld [vmem:[#allocation4] sm:$0xff]
    %s1312 = scalar_lea.vmem [#allocation2], 96
    %v1313 = vld [vmem:[%s1312] sm:$0xff]
    %v1314 = vld [vmem:[%s1312 + $0x8] sm:$0xff]
    %v1315 = vunpack.c.l.bf16 %v1313
    %v1316 = vunpack.c.h.bf16 %v1313
    %v1317 = vunpack.c.l.bf16 %v1314
    %v1318 = vunpack.c.h.bf16 %v1314
    %v1319 = vpack.c.bf16 %v1310, %v1310
    %1320 = vmatprep.subr.bf16.mxu0 %v596
    %1321 = vmatpush1.bf16.msra.mxu0 %v595
    %1322 = vmatprep.subr.bf16.mxu0 %v592
    %1323 = vmatpush1.bf16.msra.mxu0 %v591
    %1324 = vmatprep.subr.bf16.mxu0 %v588
    %1325 = vmatpush1.bf16.msra.mxu0 %v587
    %1326 = vmatprep.subr.bf16.mxu0 %v584
    %1327 = vmatpush1.bf16.msra.mxu0 %v583
    %1328 = vmatprep.subr.bf16.mxu0 %v580
    %1329 = vmatpush1.bf16.msra.mxu0 %v579
    %1330 = vmatprep.subr.bf16.mxu0 %v576
    %1331 = vmatpush1.bf16.msra.mxu0 %v575
    %1332 = vmatprep.subr.bf16.mxu0 %v572
    %1333 = vmatpush1.bf16.msra.mxu0 %v571
    %1334 = vmatprep.subr.bf16.mxu0 %v568
    %1335 = vmatpush1.bf16.msra.mxu0 %v567
    %1336 = vmatprep.subr.bf16.mxu0 0
    %1337 = vmatpush2.bf16.msra.mxu0 0
    %1338 = vmatprep.subr.bf16.mxu0 0
    %1339 = vmatpush2.bf16.msra.mxu0 0
    %1340 = vmatprep.subr.bf16.mxu0 0
    %1341 = vmatpush2.bf16.msra.mxu0 0
    %1342 = vmatprep.subr.bf16.mxu0 0
    %1343 = vmatpush2.bf16.msra.mxu0 0
    %1344 = vmatprep.subr.bf16.mxu0 0
    %1345 = vmatpush2.bf16.msra.mxu0 0
    %1346 = vmatprep.subr.bf16.mxu0 0
    %1347 = vmatpush2.bf16.msra.mxu0 0
    %1348 = vmatprep.subr.bf16.mxu0 0
    %1349 = vmatpush2.bf16.msra.mxu0 0
    %1350 = vmatprep.subr.bf16.mxu0 0
    %1351 = vmatpush2.bf16.msra.mxu0 0
    %1352 = vmatprep.mubr.bf16.mxu0 0
    %1353 = vmatmul.mubr.bf16.gmra.mxu0 %v1319
    %v1354 = vpop.f32.mrf.mxu0
    %v1355 = vadd.f32 0.0, %v1354
    %v1356 = vpop.f32.mrf.mxu0
    %v1357 = vadd.f32 0.0, %v1356
    %v1358 = vpop.f32.mrf.mxu0
    %v1359 = vpop.f32.mrf.mxu0
    %1360 = vdwg.mxu0
    %1361 = vmatprep.subr.bf16.mxu0 %v598
    %1362 = vmatpush1.bf16.msra.mxu0 %v597
    %1363 = vmatprep.subr.bf16.mxu0 %v594
    %1364 = vmatpush1.bf16.msra.mxu0 %v593
    %1365 = vmatprep.subr.bf16.mxu0 %v590
    %1366 = vmatpush1.bf16.msra.mxu0 %v589
    %1367 = vmatprep.subr.bf16.mxu0 %v586
    %1368 = vmatpush1.bf16.msra.mxu0 %v585
    %1369 = vmatprep.subr.bf16.mxu0 %v582
    %1370 = vmatpush1.bf16.msra.mxu0 %v581
    %1371 = vmatprep.subr.bf16.mxu0 %v578
    %1372 = vmatpush1.bf16.msra.mxu0 %v577
    %1373 = vmatprep.subr.bf16.mxu0 %v574
    %1374 = vmatpush1.bf16.msra.mxu0 %v573
    %1375 = vmatprep.subr.bf16.mxu0 %v570
    %1376 = vmatpush1.bf16.msra.mxu0 %v569
    %1377 = vmatprep.subr.bf16.mxu0 0
    %1378 = vmatpush2.bf16.msra.mxu0 0
    %1379 = vmatprep.subr.bf16.mxu0 0
    %1380 = vmatpush2.bf16.msra.mxu0 0
    %1381 = vmatprep.subr.bf16.mxu0 0
    %1382 = vmatpush2.bf16.msra.mxu0 0
    %1383 = vmatprep.subr.bf16.mxu0 0
    %1384 = vmatpush2.bf16.msra.mxu0 0
    %1385 = vmatprep.subr.bf16.mxu0 0
    %1386 = vmatpush2.bf16.msra.mxu0 0
    %1387 = vmatprep.subr.bf16.mxu0 0
    %1388 = vmatpush2.bf16.msra.mxu0 0
    %1389 = vmatprep.subr.bf16.mxu0 0
    %1390 = vmatpush2.bf16.msra.mxu0 0
    %1391 = vmatprep.subr.bf16.mxu0 0
    %1392 = vmatpush2.bf16.msra.mxu0 0
    %1393 = vmatprep.mubr.bf16.mxu0 0
    %1394 = vmatmul.mubr.bf16.gmra.mxu0 %v1319
    %v1395 = vpop.f32.mrf.mxu0
    %v1396 = vadd.f32 0.0, %v1395
    %v1397 = vpop.f32.mrf.mxu0
    %v1398 = vadd.f32 0.0, %v1397
    %v1399 = vpop.f32.mrf.mxu0
    %v1400 = vpop.f32.mrf.mxu0
    %1401 = vdwg.mxu0
    %v1402 = vadd.f32 %v1315, %v1355
    %v1403 = vadd.f32 %v1316, %v1357
    %v1404 = vadd.f32 %v1317, %v1396
    %v1405 = vadd.f32 %v1318, %v1398
    %v1406 = vtanh.pop %v1402
    %v1407 = vtanh.pop %v1403
    %v1408 = vtanh.pop %v1404
    %v1409 = vtanh.pop %v1405
    %v1410 = vmul.f32 %v1406, 0.5
    %v1411 = vadd.f32 %v1410, 0.5
    %v1412 = vmul.f32 %v1407, 0.5
    %v1413 = vadd.f32 %v1412, 0.5
    %v1414 = vmul.f32 %v1409, 0.5
    %v1415 = vadd.f32 %v1414, 0.5
    %v1416 = vmul.f32 %v1413, %v1311
    %v1417 = vmul.f32 %v1411, %v1408
    %v1418 = vadd.f32 %v1416, %v1417
    %v1419 = vtanh.pop %v1418
    %v1420 = vmul.f32 %v1415, %v1419
    %1421 = vst [vmem:[#allocation3] sm:$0xff] %v1420
    %1422 = vst [vmem:[#allocation4] sm:$0xff] %v1418
    %s1423 = scalar_lea.vmem [#allocation11], 48
    %1424 = vst [vmem:[%s1423] sm:$0xff] %v1420
    %v1425 = vld [vmem:[#allocation3] sm:$0xff]
    %v1426 = vld [vmem:[#allocation4] sm:$0xff]
    %s1427 = scalar_lea.vmem [#allocation2], 112
    %v1428 = vld [vmem:[%s1427] sm:$0xff]
    %v1429 = vld [vmem:[%s1427 + $0x8] sm:$0xff]
    %v1430 = vunpack.c.l.bf16 %v1428
    %v1431 = vunpack.c.h.bf16 %v1428
    %v1432 = vunpack.c.l.bf16 %v1429
    %v1433 = vunpack.c.h.bf16 %v1429
    %v1434 = vpack.c.bf16 %v1425, %v1425
    %1435 = vmatprep.subr.bf16.mxu0 %v596
    %1436 = vmatpush1.bf16.msra.mxu0 %v595
    %1437 = vmatprep.subr.bf16.mxu0 %v592
    %1438 = vmatpush1.bf16.msra.mxu0 %v591
    %1439 = vmatprep.subr.bf16.mxu0 %v588
    %1440 = vmatpush1.bf16.msra.mxu0 %v587
    %1441 = vmatprep.subr.bf16.mxu0 %v584
    %1442 = vmatpush1.bf16.msra.mxu0 %v583
    %1443 = vmatprep.subr.bf16.mxu0 %v580
    %1444 = vmatpush1.bf16.msra.mxu0 %v579
    %1445 = vmatprep.subr.bf16.mxu0 %v576
    %1446 = vmatpush1.bf16.msra.mxu0 %v575
    %1447 = vmatprep.subr.bf16.mxu0 %v572
    %1448 = vmatpush1.bf16.msra.mxu0 %v571
    %1449 = vmatprep.subr.bf16.mxu0 %v568
    %1450 = vmatpush1.bf16.msra.mxu0 %v567
    %1451 = vmatprep.subr.bf16.mxu0 0
    %1452 = vmatpush2.bf16.msra.mxu0 0
    %1453 = vmatprep.subr.bf16.mxu0 0
    %1454 = vmatpush2.bf16.msra.mxu0 0
    %1455 = vmatprep.subr.bf16.mxu0 0
    %1456 = vmatpush2.bf16.msra.mxu0 0
    %1457 = vmatprep.subr.bf16.mxu0 0
    %1458 = vmatpush2.bf16.msra.mxu0 0
    %1459 = vmatprep.subr.bf16.mxu0 0
    %1460 = vmatpush2.bf16.msra.mxu0 0
    %1461 = vmatprep.subr.bf16.mxu0 0
    %1462 = vmatpush2.bf16.msra.mxu0 0
    %1463 = vmatprep.subr.bf16.mxu0 0
    %1464 = vmatpush2.bf16.msra.mxu0 0
    %1465 = vmatprep.subr.bf16.mxu0 0
    %1466 = vmatpush2.bf16.msra.mxu0 0
    %1467 = vmatprep.mubr.bf16.mxu0 0
    %1468 = vmatmul.mubr.bf16.gmra.mxu0 %v1434
    %v1469 = vpop.f32.mrf.mxu0
    %v1470 = vadd.f32 0.0, %v1469
    %v1471 = vpop.f32.mrf.mxu0
    %v1472 = vadd.f32 0.0, %v1471
    %v1473 = vpop.f32.mrf.mxu0
    %v1474 = vpop.f32.mrf.mxu0
    %1475 = vdwg.mxu0
    %1476 = vmatprep.subr.bf16.mxu0 %v598
    %1477 = vmatpush1.bf16.msra.mxu0 %v597
    %1478 = vmatprep.subr.bf16.mxu0 %v594
    %1479 = vmatpush1.bf16.msra.mxu0 %v593
    %1480 = vmatprep.subr.bf16.mxu0 %v590
    %1481 = vmatpush1.bf16.msra.mxu0 %v589
    %1482 = vmatprep.subr.bf16.mxu0 %v586
    %1483 = vmatpush1.bf16.msra.mxu0 %v585
    %1484 = vmatprep.subr.bf16.mxu0 %v582
    %1485 = vmatpush1.bf16.msra.mxu0 %v581
    %1486 = vmatprep.subr.bf16.mxu0 %v578
    %1487 = vmatpush1.bf16.msra.mxu0 %v577
    %1488 = vmatprep.subr.bf16.mxu0 %v574
    %1489 = vmatpush1.bf16.msra.mxu0 %v573
    %1490 = vmatprep.subr.bf16.mxu0 %v570
    %1491 = vmatpush1.bf16.msra.mxu0 %v569
    %1492 = vmatprep.subr.bf16.mxu0 0
    %1493 = vmatpush2.bf16.msra.mxu0 0
    %1494 = vmatprep.subr.bf16.mxu0 0
    %1495 = vmatpush2.bf16.msra.mxu0 0
    %1496 = vmatprep.subr.bf16.mxu0 0
    %1497 = vmatpush2.bf16.msra.mxu0 0
    %1498 = vmatprep.subr.bf16.mxu0 0
    %1499 = vmatpush2.bf16.msra.mxu0 0
    %1500 = vmatprep.subr.bf16.mxu0 0
    %1501 = vmatpush2.bf16.msra.mxu0 0
    %1502 = vmatprep.subr.bf16.mxu0 0
    %1503 = vmatpush2.bf16.msra.mxu0 0
    %1504 = vmatprep.subr.bf16.mxu0 0
    %1505 = vmatpush2.bf16.msra.mxu0 0
    %1506 = vmatprep.subr.bf16.mxu0 0
    %1507 = vmatpush2.bf16.msra.mxu0 0
    %1508 = vmatprep.mubr.bf16.mxu0 0
    %1509 = vmatmul.mubr.bf16.gmra.mxu0 %v1434
    %v1510 = vpop.f32.mrf.mxu0
    %v1511 = vadd.f32 0.0, %v1510
    %v1512 = vpop.f32.mrf.mxu0
    %v1513 = vadd.f32 0.0, %v1512
    %v1514 = vpop.f32.mrf.mxu0
    %v1515 = vpop.f32.mrf.mxu0
    %1516 = vdwg.mxu0
    %v1517 = vadd.f32 %v1430, %v1470
    %v1518 = vadd.f32 %v1431, %v1472
    %v1519 = vadd.f32 %v1432, %v1511
    %v1520 = vadd.f32 %v1433, %v1513
    %v1521 = vtanh.pop %v1517
    %v1522 = vtanh.pop %v1518
    %v1523 = vtanh.pop %v1519
    %v1524 = vtanh.pop %v1520
    %v1525 = vmul.f32 %v1521, 0.5
    %v1526 = vadd.f32 %v1525, 0.5
    %v1527 = vmul.f32 %v1522, 0.5
    %v1528 = vadd.f32 %v1527, 0.5
    %v1529 = vmul.f32 %v1524, 0.5
    %v1530 = vadd.f32 %v1529, 0.5
    %v1531 = vmul.f32 %v1528, %v1426
    %v1532 = vmul.f32 %v1526, %v1523
    %v1533 = vadd.f32 %v1531, %v1532
    %v1534 = vtanh.pop %v1533
    %v1535 = vmul.f32 %v1530, %v1534
    %1536 = vst [vmem:[#allocation3] sm:$0xff] %v1535
    %1537 = vst [vmem:[#allocation4] sm:$0xff] %v1533
    %s1538 = scalar_lea.vmem [#allocation11], 56
    %1539 = vst [vmem:[%s1538] sm:$0xff] %v1535
    // Predicated region
    $region34: #{tpu_custom_call.1} parent=1 // pred_check
      %p1540 = pneg %p63
    $region35: #{tpu_custom_call.1} parent=1 // pred_check_branch
      %1542 = sbr.rel (%p1540) target = $region37
    $region36: #{tpu_custom_call.1} parent=1 // pred_region
      %v1543 = vld [vmem:[#allocation4] sm:$0xff]
      %1544 = vst [vmem:[#allocation12] sm:$0xff] %v1543
    $region37: #{tpu_custom_call.1} parent=1 // pred_fallthru
      _
    // Predicated region
    $region38: #{tpu_custom_call.1} parent=1 // pred_check
      _
    $region39: #{tpu_custom_call.1} parent=1 // pred_check_branch
      %1546 = sbr.rel (0) target = $region41
    $region40: #{tpu_custom_call.1} parent=1 // pred_region
      %s1548 = ssub.s32 1024, 1024
      %1549 = vsyncadd [#allocation7], %s1548
      %s1550 = sshll.u32 [#allocation11], 4
      %s1551 = int_to_ptr.vmem [resolvable:$true] %s1550
      %1556 = dma.vmem_to_hbm [thread:$0]  %s1551, 1024, %s4, [#allocation7], 128, 128, 8
    $region41: #{tpu_custom_call.1} parent=1 // pred_fallthru
      _
    // Predicated region
    $region42: #{tpu_custom_call.1} parent=1 // pred_check
      _
    $region43: #{tpu_custom_call.1} parent=1 // pred_check_branch
      %1558 = sbr.rel (0) target = $region45
    $region44: #{tpu_custom_call.1} parent=1 // pred_region
      %s1560 = ssub.s32 128, 128
      %1561 = vsyncadd [#allocation13], %s1560
      %s1563 = sshll.u32 [#allocation12], 4
      %s1564 = int_to_ptr.vmem [resolvable:$true] %s1563
      %1566 = dma.vmem_to_hbm [thread:$0]  %s1564, 128, %s5, [#allocation13]
    $region45: #{tpu_custom_call.1} parent=1 // pred_fallthru
      _
    // Predicated region
    $region46: #{tpu_custom_call.1} parent=1 // pred_check
      _
    $region47: #{tpu_custom_call.1} parent=1 // pred_check_branch
      %1568 = sbr.rel (0) target = $region49
    $region48: #{tpu_custom_call.1} parent=1 // pred_region
      %1569 = dma.done [#allocation7], 1024
    $region49: #{tpu_custom_call.1} parent=1 // pred_fallthru
      _
    // Predicated region
    $region50: #{tpu_custom_call.1} parent=1 // pred_check
      _
    $region51: #{tpu_custom_call.1} parent=1 // pred_check_branch
      %1571 = sbr.rel (0) target = $region53
    $region52: #{tpu_custom_call.1} parent=1 // pred_region
      %1572 = dma.done [#allocation13], 128
    $region53: #{tpu_custom_call.1} parent=1 // pred_fallthru
      _
    %1573 = vsyncpa [#allocation6], 1
    %1574 = vsyncpa [#allocation9], 1
    %1575 = vsyncpa [#allocation7], 1
    %1576 = vsyncpa [#allocation13], 1

</llo_original>
